<compile_context>
chip_gen: v7x
topology: tpu7x:2x2x1
jax: 0.10.0
libtpu: 0.0.40
codegen_flags: <defaults>
</compile_context>

<pallas_src>
import numpy as np

import jax
import jax.numpy as jnp
from jax.experimental import pallas as pl
from jax.experimental.pallas import tpu as pltpu

# ----------------------------- configuration --------------------------------
INPUT_DIM = 2                       # x feature dim and discriminator output dim
PARAM_DIM = 1                       # conditioning parameter dim
HIDDEN_DIM = 2                      # Discriminator hidden_dimension
INNER = 20                          # PINA FeedForward default inner_size
STACK = 2 * INNER                   # 40: stacked encoder+condition width
IN_STACK = INPUT_DIM + PARAM_DIM    # 3: stacked [x; c] input width
DTYPE = jnp.float32

LANE = 128
TB_MAX = 2048                       # batch lanes per grid step (multiple of 128)


def _round8(n):
    return ((n + 7) // 8) * 8


def _round_up(n, m):
    return ((n + m - 1) // m) * m


# Packed slab layout AFTER host-side folding / block-diagonal stacking.
_PARAM_SHAPES = (
    ("w1", (STACK, IN_STACK)),     # blockdiag(We1, Wc1)                      (40, 3)
    ("b1", (STACK, 1)),            # [be1; bc1]
    ("w2", (STACK, STACK)),        # blockdiag(We2, Wc2)                      (40, 40)
    ("b2", (STACK, 1)),            # [be2; bc2]
    ("wf", (INNER, STACK)),        # [Wd1[:,0:2]@We3 | Wd1[:,2:4]@Wc3]        (20, 40)
    ("bf", (INNER, 1)),            # Wd1[:,0:2]@be3 + Wd1[:,2:4]@bc3 + bd1
    ("wd2", (INNER, INNER)),       # (20, 20)
    ("bd2", (INNER, 1)),
    ("wd3", (INPUT_DIM, INNER)),   # (2, 20)
    ("bd3", (INPUT_DIM, 1)),
)
_SHAPE = dict(_PARAM_SHAPES)
_OFFSET = {}
_off = 0
for _name, (_r, _c) in _PARAM_SHAPES:
    _OFFSET[_name] = _off
    _off += _round8(_r)            # every block starts on an 8-sublane boundary
SLAB_ROWS = _round8(_off)          # 272
SLAB_COLS = LANE                   # lane-dense slab (trivial HBM cost)


def _get(w_ref, name):
    """Static (zero-cost-index) slice of one packed parameter."""
    r, c = _SHAPE[name]
    return w_ref[pl.ds(_OFFSET[name], r), pl.ds(0, c)]


# ------------------------------- kernel -------------------------------------
def discriminator_kernel(w_ref, u_ref, o_ref):
    u = u_ref[...]                                       # (3, TB): rows = [x0; x1; c]

    def dot(a, b):
        return jnp.dot(a, b, precision="highest", preferred_element_type=jnp.float32)

    # layer 1: block-diagonal enc/cond input layers           (40, TB)
    s = jnp.tanh(dot(_get(w_ref, "w1"), u) + _get(w_ref, "b1"))
    # layer 2: block-diagonal enc/cond hidden layers          (40, TB)
    s = jnp.tanh(dot(_get(w_ref, "w2"), s) + _get(w_ref, "b2"))
    # decoder layer 1 (enc/cond output layers folded in)      (20, TB)
    d = jnp.tanh(dot(_get(w_ref, "wf"), s) + _get(w_ref, "bf"))
    # decoder layer 2                                         (20, TB)
    d = jnp.tanh(dot(_get(w_ref, "wd2"), d) + _get(w_ref, "bd2"))
    # decoder output layer                                    (2, TB)
    o_ref[...] = (dot(_get(w_ref, "wd3"), d) + _get(w_ref, "bd3")).astype(o_ref.dtype)


# ------------------------------- params -------------------------------------
def init_linear(key, fan_in, fan_out):
    """PyTorch nn.Linear init: U(-1/sqrt(fan_in), 1/sqrt(fan_in)); weight stored (out, in)."""
    kw, kb = jax.random.split(key)
    bound = 1.0 / float(fan_in) ** 0.5
    w = jax.random.uniform(kw, (fan_out, fan_in), DTYPE, -bound, bound)
    b = jax.random.uniform(kb, (fan_out,), DTYPE, -bound, bound)
    return w, b


def init_discriminator_params(key):
    ks = jax.random.split(key, 9)
    p = {}
    p["we1"], p["be1"] = init_linear(ks[0], INPUT_DIM, INNER)
    p["we2"], p["be2"] = init_linear(ks[1], INNER, INNER)
    p["we3"], p["be3"] = init_linear(ks[2], INNER, HIDDEN_DIM)
    p["wc1"], p["bc1"] = init_linear(ks[3], PARAM_DIM, INNER)
    p["wc2"], p["bc2"] = init_linear(ks[4], INNER, INNER)
    p["wc3"], p["bc3"] = init_linear(ks[5], INNER, HIDDEN_DIM)
    p["wd1"], p["bd1"] = init_linear(ks[6], 2 * HIDDEN_DIM, INNER)
    p["wd2"], p["bd2"] = init_linear(ks[7], INNER, INNER)
    p["wd3"], p["bd3"] = init_linear(ks[8], INNER, INPUT_DIM)
    return p


def pack_params(params):
    """Fold + block-diagonalize + pack ALL params into one lane-dense f32 slab (host-side, once)."""
    p = {k: np.asarray(v, np.float32) for k, v in params.items()}

    w1 = np.zeros((STACK, IN_STACK), np.float32)
    w1[:INNER, :INPUT_DIM] = p["we1"]
    w1[INNER:, INPUT_DIM:] = p["wc1"]
    b1 = np.concatenate([p["be1"], p["bc1"]])[:, None]

    w2 = np.zeros((STACK, STACK), np.float32)
    w2[:INNER, :INNER] = p["we2"]
    w2[INNER:, INNER:] = p["wc2"]
    b2 = np.concatenate([p["be2"], p["bc2"]])[:, None]

    # Fold the (linear) enc/cond output layers into the decoder's first layer.
    w_de = p["wd1"][:, :HIDDEN_DIM] @ p["we3"]                   # (20, 20)
    w_dc = p["wd1"][:, HIDDEN_DIM:] @ p["wc3"]                   # (20, 20)
    wf = np.concatenate([w_de, w_dc], axis=1)                    # (20, 40)
    bf = (p["wd1"][:, :HIDDEN_DIM] @ p["be3"]
          + p["wd1"][:, HIDDEN_DIM:] @ p["bc3"] + p["bd1"])[:, None]

    blocks = (("w1", w1), ("b1", b1), ("w2", w2), ("b2", b2),
              ("wf", wf), ("bf", bf),
              ("wd2", p["wd2"]), ("bd2", p["bd2"][:, None]),
              ("wd3", p["wd3"]), ("bd3", p["bd3"][:, None]))

    slab = np.zeros((SLAB_ROWS, SLAB_COLS), np.float32)
    for name, val in blocks:
        r, c = _SHAPE[name]
        slab[_OFFSET[name]:_OFFSET[name] + r, :c] = val
    return jnp.asarray(slab)


# ------------------------------- wrapper -------------------------------------
def _choose_tb(bp128):
    """Pick the batch tile: big to amortize per-step overhead, but keep >=2 grid
    steps when there's enough work (v7x has 2 TensorCores on the parallel axis)."""
    tb = min(TB_MAX, bp128)
    if bp128 >= 2 * LANE and bp128 // tb < 2:
        tb = max(LANE, (bp128 // (2 * LANE)) * LANE)
    return tb


@jax.jit
def discriminator_forward(x, cond, slab):
    """x: (B, INPUT_DIM), cond: (B, PARAM_DIM), slab: packed params -> (B, INPUT_DIM)."""
    B = x.shape[0]
    bp128 = _round_up(B, LANE)
    tb = _choose_tb(bp128)
    n_blocks = pl.cdiv(bp128, tb)
    Bp = n_blocks * tb

    # One stacked, batch-on-lanes input: rows = [x0; x1; c], padded to Bp lanes.
    u = jnp.concatenate([x.astype(DTYPE), cond.astype(DTYPE)], axis=-1).T   # (3, B)
    u = jnp.pad(u, ((0, 0), (0, Bp - B)))                                    # (3, Bp)

    flops_per_sample = 2 * (STACK * IN_STACK + STACK * STACK
                            + INNER * STACK + INNER * INNER + INPUT_DIM * INNER)
    cost = pl.CostEstimate(
        flops=flops_per_sample * Bp,
        transcendentals=(2 * STACK + 2 * INNER) * Bp,
        bytes_accessed=4 * (Bp * (IN_STACK + INPUT_DIM) + SLAB_ROWS * SLAB_COLS),
    )

    out_t = pl.pallas_call(
        discriminator_kernel,
        out_shape=jax.ShapeDtypeStruct((INPUT_DIM, Bp), DTYPE),
        grid=(n_blocks,),
        in_specs=[
            pl.BlockSpec((SLAB_ROWS, SLAB_COLS), lambda i: (0, 0)),  # weights: VMEM-resident
            pl.BlockSpec((IN_STACK, tb), lambda i: (0, i)),          # stacked inputs
        ],
        out_specs=pl.BlockSpec((INPUT_DIM, tb), lambda i: (0, i)),   # lane-dense output
        compiler_params=pltpu.CompilerParams(
            dimension_semantics=("parallel",),   # v7x: shard batch steps over 2 TCs
        ),
        cost_estimate=cost,
    )(slab, u)

    return out_t[:, :B].T


# ------------------------------- reference -----------------------------------
def discriminator_reference(x, cond, p):
    """Pure-JAX reference with the ORIGINAL (unfolded) parameters, [B, feat] layout."""
    def dot(a, b):
        return jnp.dot(a, b, precision="highest")

    def ff(inp, w1, b1, w2, b2, w3, b3):
        h = jnp.tanh(dot(inp, w1.T) + b1)
        h = jnp.tanh(dot(h, w2.T) + b2)
        return dot(h, w3.T) + b3

    enc = ff(x, p["we1"], p["be1"], p["we2"], p["be2"], p["we3"], p["be3"])
    cnd = ff(cond, p["wc1"], p["bc1"], p["wc2"], p["bc2"], p["wc3"], p["bc3"])
    cat = jnp.concatenate([enc, cnd], axis=-1)
    return ff(cat, p["wd1"], p["bd1"], p["wd2"], p["bd2"], p["wd3"], p["bd3"])


if __name__ == "__main__":
    root = jax.random.PRNGKey(0)
    k_params, kx, kc, kx2, kc2 = jax.random.split(root, 5)

    params = init_discriminator_params(k_params)
    slab = pack_params(params)   # built once, reused for every forward call

    # Small shapes consistent with the test module (single grid step).
    batch = 8
    x = jax.random.uniform(kx, (batch, INPUT_DIM), DTYPE)
    cond = jax.random.uniform(kc, (batch, PARAM_DIM), DTYPE)
    out = jax.block_until_ready(discriminator_forward(x, cond, slab))
    ref = discriminator_reference(x, cond, params)
    assert out.shape == (batch, INPUT_DIM)
    assert jnp.allclose(out, ref, atol=5e-5, rtol=1e-4), "mismatch vs JAX reference (B=8)"

    # Exercise a multi-step batch grid (TB capped so n_blocks >= 2) + ragged tail.
    batch2 = 384
    x2 = jax.random.uniform(kx2, (batch2, INPUT_DIM), DTYPE)
    cond2 = jax.random.uniform(kc2, (batch2, PARAM_DIM), DTYPE)
    out2 = jax.block_until_ready(discriminator_forward(x2, cond2, slab))
    ref2 = discriminator_reference(x2, cond2, params)
    assert out2.shape == (batch2, INPUT_DIM)
    assert jnp.allclose(out2, ref2, atol=5e-5, rtol=1e-4), "mismatch vs JAX reference (B=384)"

    print("KERNEL_OK")
</pallas_src>

<mosaic_0001>
module attributes {stable_mosaic.version = 11 : i64} {
  func.func @discriminator_kernel(%arg0: i32, %arg1: memref<272x128xf32, #tpu.memory_space<vmem>>, %arg2: memref<3x128xf32, #tpu.memory_space<vmem>>, %arg3: memref<2x128xf32, #tpu.memory_space<vmem>>) attributes {dimension_semantics = [#tpu.dimension_semantics<parallel>], iteration_bounds = array<i64: 1>, scalar_prefetch = 0 : i64, scratch_operands = 0 : i64, tpu.core_type = #tpu.core_type<tc>, window_params = [{pipeline_mode = #tpu.pipeline_mode<synchronous>, transform_indices = @transform_0, window_bounds = array<i64: 272, 128>}, {transform_indices = @transform_1, window_bounds = array<i64: 3, 128>}, {transform_indices = @transform_2, window_bounds = array<i64: 2, 128>}]} {
    %c0 = arith.constant 0 : index
    %c0_0 = arith.constant 0 : index
    %0 = vector.load %arg2[%c0, %c0_0] : memref<3x128xf32, #tpu.memory_space<vmem>>, vector<3x128xf32>
    %c0_1 = arith.constant 0 : index
    %c0_2 = arith.constant 0 : index
    %1 = vector.load %arg1[%c0_1, %c0_2] : memref<272x128xf32, #tpu.memory_space<vmem>>, vector<40x3xf32>
    %cst = arith.constant dense<0.000000e+00> : vector<40x128xf32>
    %2 = tpu.matmul %1, %0, %cst {dimension_numbers = #tpu.dot_dimension_numbers<[1], [0], [0], [1], [0, 0, 1, 1], [], []>, precision = #tpu.contract_precision<fp32>} : vector<40x3xf32>, vector<3x128xf32>, vector<40x128xf32> -> vector<40x128xf32>
    %c40 = arith.constant 40 : index
    %c0_3 = arith.constant 0 : index
    %3 = vector.load %arg1[%c40, %c0_3] : memref<272x128xf32, #tpu.memory_space<vmem>>, vector<40x1xf32>
    %4 = vector.broadcast %3 : vector<40x1xf32> to vector<40x128xf32>
    %5 = arith.addf %2, %4 : vector<40x128xf32>
    %6 = math.tanh %5 : vector<40x128xf32>
    %c80 = arith.constant 80 : index
    %c0_4 = arith.constant 0 : index
    %7 = vector.load %arg1[%c80, %c0_4] : memref<272x128xf32, #tpu.memory_space<vmem>>, vector<40x40xf32>
    %cst_5 = arith.constant dense<0.000000e+00> : vector<40x128xf32>
    %8 = tpu.matmul %7, %6, %cst_5 {dimension_numbers = #tpu.dot_dimension_numbers<[1], [0], [0], [1], [0, 0, 1, 1], [], []>, precision = #tpu.contract_precision<fp32>} : vector<40x40xf32>, vector<40x128xf32>, vector<40x128xf32> -> vector<40x128xf32>
    %c120 = arith.constant 120 : index
    %c0_6 = arith.constant 0 : index
    %9 = vector.load %arg1[%c120, %c0_6] : memref<272x128xf32, #tpu.memory_space<vmem>>, vector<40x1xf32>
    %10 = vector.broadcast %9 : vector<40x1xf32> to vector<40x128xf32>
    %11 = arith.addf %8, %10 : vector<40x128xf32>
    %12 = math.tanh %11 : vector<40x128xf32>
    %c160 = arith.constant 160 : index
    %c0_7 = arith.constant 0 : index
    %13 = vector.load %arg1[%c160, %c0_7] : memref<272x128xf32, #tpu.memory_space<vmem>>, vector<20x40xf32>
    %cst_8 = arith.constant dense<0.000000e+00> : vector<20x128xf32>
    %14 = tpu.matmul %13, %12, %cst_8 {dimension_numbers = #tpu.dot_dimension_numbers<[1], [0], [0], [1], [0, 0, 1, 1], [], []>, precision = #tpu.contract_precision<fp32>} : vector<20x40xf32>, vector<40x128xf32>, vector<20x128xf32> -> vector<20x128xf32>
    %c184 = arith.constant 184 : index
    %c0_9 = arith.constant 0 : index
    %15 = vector.load %arg1[%c184, %c0_9] : memref<272x128xf32, #tpu.memory_space<vmem>>, vector<20x1xf32>
    %16 = vector.broadcast %15 : vector<20x1xf32> to vector<20x128xf32>
    %17 = arith.addf %14, %16 : vector<20x128xf32>
    %18 = math.tanh %17 : vector<20x128xf32>
    %c208 = arith.constant 208 : index
    %c0_10 = arith.constant 0 : index
    %19 = vector.load %arg1[%c208, %c0_10] : memref<272x128xf32, #tpu.memory_space<vmem>>, vector<20x20xf32>
    %cst_11 = arith.constant dense<0.000000e+00> : vector<20x128xf32>
    %20 = tpu.matmul %19, %18, %cst_11 {dimension_numbers = #tpu.dot_dimension_numbers<[1], [0], [0], [1], [0, 0, 1, 1], [], []>, precision = #tpu.contract_precision<fp32>} : vector<20x20xf32>, vector<20x128xf32>, vector<20x128xf32> -> vector<20x128xf32>
    %c232 = arith.constant 232 : index
    %c0_12 = arith.constant 0 : index
    %21 = vector.load %arg1[%c232, %c0_12] : memref<272x128xf32, #tpu.memory_space<vmem>>, vector<20x1xf32>
    %22 = vector.broadcast %21 : vector<20x1xf32> to vector<20x128xf32>
    %23 = arith.addf %20, %22 : vector<20x128xf32>
    %24 = math.tanh %23 : vector<20x128xf32>
    %c256 = arith.constant 256 : index
    %c0_13 = arith.constant 0 : index
    %25 = vector.load %arg1[%c256, %c0_13] : memref<272x128xf32, #tpu.memory_space<vmem>>, vector<2x20xf32>
    %cst_14 = arith.constant dense<0.000000e+00> : vector<2x128xf32>
    %26 = tpu.matmul %25, %24, %cst_14 {dimension_numbers = #tpu.dot_dimension_numbers<[1], [0], [0], [1], [0, 0, 1, 1], [], []>, precision = #tpu.contract_precision<fp32>} : vector<2x20xf32>, vector<20x128xf32>, vector<2x128xf32> -> vector<2x128xf32>
    %c264 = arith.constant 264 : index
    %c0_15 = arith.constant 0 : index
    %27 = vector.load %arg1[%c264, %c0_15] : memref<272x128xf32, #tpu.memory_space<vmem>>, vector<2x1xf32>
    %28 = vector.broadcast %27 : vector<2x1xf32> to vector<2x128xf32>
    %29 = arith.addf %26, %28 : vector<2x128xf32>
    %c0_16 = arith.constant 0 : index
    %c0_17 = arith.constant 0 : index
    %30 = vector.load %arg3[%c0_16, %c0_17] : memref<2x128xf32, #tpu.memory_space<vmem>>, vector<2x128xf32>
    tpu.vector_store %arg3[%c0_16, %c0_17], %29 {strides = array<i32>} : memref<2x128xf32, #tpu.memory_space<vmem>>, vector<2x128xf32>,
    return
  }
  func.func @transform_0(%arg0: i32) -> (i32, i32) {
    %c0_i32 = arith.constant 0 : i32
    %c0_i32_0 = arith.constant 0 : i32
    %c0_i32_1 = arith.constant 0 : i32
    return %c0_i32, %c0_i32_0 : i32, i32
  }
  func.func @transform_1(%arg0: i32) -> (i32, i32) {
    %c0_i32 = arith.constant 0 : i32
    %c0_i32_0 = arith.constant 0 : i32
    return %c0_i32, %arg0 : i32, i32
  }
  func.func @transform_2(%arg0: i32) -> (i32, i32) {
    %c0_i32 = arith.constant 0 : i32
    %c0_i32_0 = arith.constant 0 : i32
    return %c0_i32, %arg0 : i32, i32
  }
}

</mosaic_0001>

<llo_original>
// kernel: discriminator_forward.1
$region0: #{discriminator_forward.1}
  #allocation0 [shape = 'u32[]', space=smem, size = 0x4, offset = 0x4, fixed_abs, tag = 'smem constant byte address 0x4 - core index']
  #allocation1 [shape = 'u32[144,128]{1,0:T(1,128)}', space=vmem, size = 0x12000, scoped, tag = 'internal scratch']
  %s0 = inlined_call_operand.hbm [shape: f32[272,128], index: 0, kind: input, shape index: {}]
  %s1 = inlined_call_operand.vmem [shape: f32[3,128], index: 1, kind: input, shape index: {}]
  %s2 = inlined_call_operand.vmem [shape: f32[2,128], index: 2, kind: output, shape index: {}]
  %s3 = sld [smem:[#allocation0]]
  $region22: #{discriminator_forward.1} parent=0
    _
  %s5 = ssub.s32 1, %s3
  %s6 = scalar_select 0, %s5, %s3
  $region1: #{discriminator_forward.1} parent=0
    #allocation2 [shape = 'u8[139264]{0}', space=vmem, size = 0x22000, scoped, tag = 'input window, operand 0, single buffered']
    #allocation3 [shape = 's32[1]{0}', space=sflag, size = 0x4, scoped, tag = 'scoped memory for discriminator_forward.1']
    %7 = vsyncpa [#allocation3], 0
    // Predicated region
    $region2: #{discriminator_forward.1} parent=1 // pred_check
      _
    $region3: #{discriminator_forward.1} parent=1 // pred_check_branch
      %9 = sbr.rel (0) target = $region5
    $region4: #{discriminator_forward.1} parent=1 // pred_region
      %s11 = ssub.s32 4352, 4352
      %12 = vsyncadd [#allocation3], %s11
      %s13 = sshll.u32 [#allocation2], 4
      %s14 = int_to_ptr.vmem [resolvable:$true] %s13
      %19 = dma.hbm_to_vmem [thread:$0]  %s0, 4352, %s14, [#allocation3], 128, 128, 8
    $region5: #{discriminator_forward.1} parent=1 // pred_fallthru
      _
    // Predicated region
    $region6: #{discriminator_forward.1} parent=1 // pred_check
      _
    $region7: #{discriminator_forward.1} parent=1 // pred_check_branch
      %21 = sbr.rel (0) target = $region9
    $region8: #{discriminator_forward.1} parent=1 // pred_region
      _
    $region9: #{discriminator_forward.1} parent=1 // pred_fallthru
      _
    // Predicated region
    $region10: #{discriminator_forward.1} parent=1 // pred_check
      _
    $region11: #{discriminator_forward.1} parent=1 // pred_check_branch
      %23 = sbr.rel (0) target = $region13
    $region12: #{discriminator_forward.1} parent=1 // pred_region
      %24 = dma.done [#allocation3], 4352
    $region13: #{discriminator_forward.1} parent=1 // pred_fallthru
      _
    %v25 = vld [vmem:[%s1] sm:$0x7]
    %v26 = vld [vmem:[#allocation2] sm:$0xff]
    %v27 = vld [vmem:[#allocation2 + $0x8] sm:$0xff]
    %v28 = vld [vmem:[#allocation2 + $0x10] sm:$0xff]
    %v29 = vld [vmem:[#allocation2 + $0x18] sm:$0xff]
    %v30 = vld [vmem:[#allocation2 + $0x20] sm:$0xff]
    %v31 = vld [vmem:[#allocation2 + $0x28] sm:$0xff]
    %v32 = vld [vmem:[#allocation2 + $0x30] sm:$0xff]
    %v33 = vld [vmem:[#allocation2 + $0x38] sm:$0xff]
    %v34 = vld [vmem:[#allocation2 + $0x40] sm:$0xff]
    %v35 = vld [vmem:[#allocation2 + $0x48] sm:$0xff]
    %37 = vset.pattern.permute.xlu0 0
    %38 = vperm.xlu0 %37, %v31
    %v39 = vpop.permute.xlu0 %38
    %42 = vset.pattern.permute.xlu0 0
    %43 = vperm.xlu0 %42, %v32
    %v44 = vpop.permute.xlu0 %43
    %47 = vset.pattern.permute.xlu0 0
    %48 = vperm.xlu0 %47, %v33
    %v49 = vpop.permute.xlu0 %48
    %52 = vset.pattern.permute.xlu0 0
    %53 = vperm.xlu0 %52, %v34
    %v54 = vpop.permute.xlu0 %53
    %57 = vset.pattern.permute.xlu0 0
    %58 = vperm.xlu0 %57, %v35
    %v59 = vpop.permute.xlu0 %58
    %vm61 = vcmask 23552
    %v63 = vsel %vm61, %v26, 0
    %v66 = vsel %vm61, %v27, 0
    %v69 = vsel %vm61, %v28, 0
    %v72 = vsel %vm61, %v29, 0
    %v75 = vsel %vm61, %v30, 0
    %vm77 = vcmask 1042432
    %v79 = vsel %vm77, %v25, 0
    %81 = vmatprep.subr.mxu0 0.0
    %v82 = vand.u32 %v79, 4294901760
    %83 = vmatpush1.msra.mxu0 %v82
    %84 = vmatprep.subr.mxu0 0.0
    %85 = vmatpush1.msra.mxu0 0.0
    %86 = vmatprep.subr.mxu0 0.0
    %87 = vmatpush1.msra.mxu0 0.0
    %88 = vmatprep.subr.mxu0 0.0
    %89 = vmatpush1.msra.mxu0 0.0
    %90 = vmatprep.subr.mxu0 0.0
    %91 = vmatpush1.msra.mxu0 0.0
    %92 = vmatprep.subr.mxu0 0.0
    %93 = vmatpush1.msra.mxu0 0.0
    %94 = vmatprep.subr.mxu0 0.0
    %95 = vmatpush1.msra.mxu0 0.0
    %96 = vmatprep.subr.mxu0 0.0
    %97 = vmatpush1.msra.mxu0 0.0
    %98 = vmatprep.subr.mxu0 0.0
    %99 = vmatpush1.msra.mxu0 0.0
    %100 = vmatprep.subr.mxu0 0.0
    %101 = vmatpush1.msra.mxu0 0.0
    %102 = vmatprep.subr.mxu0 0.0
    %103 = vmatpush1.msra.mxu0 0.0
    %104 = vmatprep.subr.mxu0 0.0
    %105 = vmatpush1.msra.mxu0 0.0
    %106 = vmatprep.subr.mxu0 0.0
    %107 = vmatpush1.msra.mxu0 0.0
    %108 = vmatprep.subr.mxu0 0.0
    %109 = vmatpush1.msra.mxu0 0.0
    %110 = vmatprep.subr.mxu0 0.0
    %111 = vmatpush1.msra.mxu0 0.0
    %112 = vmatprep.subr.mxu0 0.0
    %113 = vmatpush1.msra.mxu0 0.0
    %114 = vmatprep.subr.mxu0 0.0
    %115 = vmatpush1.msra.mxu0 0.0
    %116 = vmatprep.subr.mxu0 0.0
    %117 = vmatpush1.msra.mxu0 0.0
    %118 = vmatprep.subr.mxu0 0.0
    %119 = vmatpush1.msra.mxu0 0.0
    %120 = vmatprep.subr.mxu0 0.0
    %121 = vmatpush1.msra.mxu0 0.0
    %122 = vmatprep.subr.mxu0 0.0
    %123 = vmatpush1.msra.mxu0 0.0
    %124 = vmatprep.subr.mxu0 0.0
    %125 = vmatpush1.msra.mxu0 0.0
    %126 = vmatprep.subr.mxu0 0.0
    %127 = vmatpush1.msra.mxu0 0.0
    %128 = vmatprep.subr.mxu0 0.0
    %129 = vmatpush1.msra.mxu0 0.0
    %130 = vmatprep.subr.mxu0 0.0
    %131 = vmatpush1.msra.mxu0 0.0
    %132 = vmatprep.subr.mxu0 0.0
    %133 = vmatpush1.msra.mxu0 0.0
    %134 = vmatprep.subr.mxu0 0.0
    %135 = vmatpush1.msra.mxu0 0.0
    %136 = vmatprep.subr.mxu0 0.0
    %137 = vmatpush1.msra.mxu0 0.0
    %138 = vmatprep.subr.mxu0 0.0
    %139 = vmatpush1.msra.mxu0 0.0
    %140 = vmatprep.subr.mxu0 0.0
    %141 = vmatpush1.msra.mxu0 0.0
    %142 = vmatprep.subr.mxu0 0.0
    %143 = vmatpush1.msra.mxu0 0.0
    %144 = vmatprep.subr.mxu0 0.0
    %145 = vmatpush1.msra.mxu0 0.0
    %146 = vmatprep.mubr.f32.mxu0 0.0
    %v147 = vand.u32 %v63, 4294901760
    %v148 = vsub.f32 %v63, %v147
    %v149 = vand.u32 %v148, 4294901760
    %v150 = vsub.f32 %v148, %v149
    %v151 = vand.u32 %v150, 4294901760
    %152 = vmatmul.mubr.f32.gmra.mrb[0].mxu0 %v151
    %v153 = vpop.f32.mrb[0].mxu0
    %v154 = vadd.f32 %v39, %v153
    %v155 = vpop.f32.mrb[0].mxu0
    %156 = vmatprep.mubr.f32.mxu0 0.0
    %v157 = vand.u32 %v66, 4294901760
    %v158 = vsub.f32 %v66, %v157
    %v159 = vand.u32 %v158, 4294901760
    %v160 = vsub.f32 %v158, %v159
    %v161 = vand.u32 %v160, 4294901760
    %162 = vmatmul.mubr.f32.gmra.mrb[0].mxu0 %v161
    %v163 = vpop.f32.mrb[0].mxu0
    %v164 = vadd.f32 %v44, %v163
    %v165 = vpop.f32.mrb[0].mxu0
    %166 = vmatprep.mubr.f32.mxu0 0.0
    %v167 = vand.u32 %v69, 4294901760
    %v168 = vsub.f32 %v69, %v167
    %v169 = vand.u32 %v168, 4294901760
    %v170 = vsub.f32 %v168, %v169
    %v171 = vand.u32 %v170, 4294901760
    %172 = vmatmul.mubr.f32.gmra.mrb[0].mxu0 %v171
    %v173 = vpop.f32.mrb[0].mxu0
    %v174 = vadd.f32 %v49, %v173
    %v175 = vpop.f32.mrb[0].mxu0
    %176 = vmatprep.mubr.f32.mxu0 0.0
    %v177 = vand.u32 %v72, 4294901760
    %v178 = vsub.f32 %v72, %v177
    %v179 = vand.u32 %v178, 4294901760
    %v180 = vsub.f32 %v178, %v179
    %v181 = vand.u32 %v180, 4294901760
    %182 = vmatmul.mubr.f32.gmra.mrb[0].mxu0 %v181
    %v183 = vpop.f32.mrb[0].mxu0
    %v184 = vadd.f32 %v54, %v183
    %v185 = vpop.f32.mrb[0].mxu0
    %186 = vmatprep.mubr.f32.mxu0 0.0
    %v187 = vand.u32 %v75, 4294901760
    %v188 = vsub.f32 %v75, %v187
    %v189 = vand.u32 %v188, 4294901760
    %v190 = vsub.f32 %v188, %v189
    %v191 = vand.u32 %v190, 4294901760
    %192 = vmatmul.mubr.f32.gmra.mrb[0].mxu0 %v191
    %v193 = vpop.f32.mrb[0].mxu0
    %v194 = vadd.f32 %v59, %v193
    %v195 = vpop.f32.mrb[0].mxu0
    %196 = vdwg.mxu0
    %197 = vmatprep.subr.mxu0 0.0
    %v198 = vand.u32 %v79, 4294901760
    %v199 = vsub.f32 %v79, %v198
    %v200 = vand.u32 %v199, 4294901760
    %v201 = vsub.f32 %v199, %v200
    %v202 = vand.u32 %v201, 4294901760
    %203 = vmatpush1.msra.mxu0 %v202
    %204 = vmatprep.subr.mxu0 0.0
    %205 = vmatpush1.msra.mxu0 0.0
    %206 = vmatprep.subr.mxu0 0.0
    %207 = vmatpush1.msra.mxu0 0.0
    %208 = vmatprep.subr.mxu0 0.0
    %209 = vmatpush1.msra.mxu0 0.0
    %210 = vmatprep.subr.mxu0 0.0
    %211 = vmatpush1.msra.mxu0 0.0
    %212 = vmatprep.subr.mxu0 0.0
    %213 = vmatpush1.msra.mxu0 0.0
    %214 = vmatprep.subr.mxu0 0.0
    %215 = vmatpush1.msra.mxu0 0.0
    %216 = vmatprep.subr.mxu0 0.0
    %217 = vmatpush1.msra.mxu0 0.0
    %218 = vmatprep.subr.mxu0 0.0
    %219 = vmatpush1.msra.mxu0 0.0
    %220 = vmatprep.subr.mxu0 0.0
    %221 = vmatpush1.msra.mxu0 0.0
    %222 = vmatprep.subr.mxu0 0.0
    %223 = vmatpush1.msra.mxu0 0.0
    %224 = vmatprep.subr.mxu0 0.0
    %225 = vmatpush1.msra.mxu0 0.0
    %226 = vmatprep.subr.mxu0 0.0
    %227 = vmatpush1.msra.mxu0 0.0
    %228 = vmatprep.subr.mxu0 0.0
    %229 = vmatpush1.msra.mxu0 0.0
    %230 = vmatprep.subr.mxu0 0.0
    %231 = vmatpush1.msra.mxu0 0.0
    %232 = vmatprep.subr.mxu0 0.0
    %233 = vmatpush1.msra.mxu0 0.0
    %234 = vmatprep.subr.mxu0 0.0
    %235 = vmatpush1.msra.mxu0 0.0
    %236 = vmatprep.subr.mxu0 0.0
    %237 = vmatpush1.msra.mxu0 0.0
    %238 = vmatprep.subr.mxu0 0.0
    %239 = vmatpush1.msra.mxu0 0.0
    %240 = vmatprep.subr.mxu0 0.0
    %241 = vmatpush1.msra.mxu0 0.0
    %242 = vmatprep.subr.mxu0 0.0
    %243 = vmatpush1.msra.mxu0 0.0
    %244 = vmatprep.subr.mxu0 0.0
    %245 = vmatpush1.msra.mxu0 0.0
    %246 = vmatprep.subr.mxu0 0.0
    %247 = vmatpush1.msra.mxu0 0.0
    %248 = vmatprep.subr.mxu0 0.0
    %249 = vmatpush1.msra.mxu0 0.0
    %250 = vmatprep.subr.mxu0 0.0
    %251 = vmatpush1.msra.mxu0 0.0
    %252 = vmatprep.subr.mxu0 0.0
    %253 = vmatpush1.msra.mxu0 0.0
    %254 = vmatprep.subr.mxu0 0.0
    %255 = vmatpush1.msra.mxu0 0.0
    %256 = vmatprep.subr.mxu0 0.0
    %257 = vmatpush1.msra.mxu0 0.0
    %258 = vmatprep.subr.mxu0 0.0
    %259 = vmatpush1.msra.mxu0 0.0
    %260 = vmatprep.subr.mxu0 0.0
    %261 = vmatpush1.msra.mxu0 0.0
    %262 = vmatprep.subr.mxu0 0.0
    %263 = vmatpush1.msra.mxu0 0.0
    %264 = vmatprep.subr.mxu0 0.0
    %265 = vmatpush1.msra.mxu0 0.0
    %266 = vmatprep.mubr.f32.mxu0 0.0
    %v267 = vand.u32 %v63, 4294901760
    %268 = vmatmul.mubr.f32.gmra.mrb[0].mxu0 %v267
    %v269 = vpop.f32.mrb[0].mxu0
    %v270 = vadd.f32 %v154, %v269
    %v271 = vpop.f32.mrb[0].mxu0
    %272 = vmatprep.mubr.f32.mxu0 0.0
    %v273 = vand.u32 %v66, 4294901760
    %274 = vmatmul.mubr.f32.gmra.mrb[0].mxu0 %v273
    %v275 = vpop.f32.mrb[0].mxu0
    %v276 = vadd.f32 %v164, %v275
    %v277 = vpop.f32.mrb[0].mxu0
    %278 = vmatprep.mubr.f32.mxu0 0.0
    %v279 = vand.u32 %v69, 4294901760
    %280 = vmatmul.mubr.f32.gmra.mrb[0].mxu0 %v279
    %v281 = vpop.f32.mrb[0].mxu0
    %v282 = vadd.f32 %v174, %v281
    %v283 = vpop.f32.mrb[0].mxu0
    %284 = vmatprep.mubr.f32.mxu0 0.0
    %v285 = vand.u32 %v72, 4294901760
    %286 = vmatmul.mubr.f32.gmra.mrb[0].mxu0 %v285
    %v287 = vpop.f32.mrb[0].mxu0
    %v288 = vadd.f32 %v184, %v287
    %v289 = vpop.f32.mrb[0].mxu0
    %290 = vmatprep.mubr.f32.mxu0 0.0
    %v291 = vand.u32 %v75, 4294901760
    %292 = vmatmul.mubr.f32.gmra.mrb[0].mxu0 %v291
    %v293 = vpop.f32.mrb[0].mxu0
    %v294 = vadd.f32 %v194, %v293
    %v295 = vpop.f32.mrb[0].mxu0
    %296 = vdwg.mxu0
    %297 = vmatprep.subr.mxu0 0.0
    %v298 = vand.u32 %v79, 4294901760
    %v299 = vsub.f32 %v79, %v298
    %300 = vmatpush1.msra.mxu0 %v299
    %301 = vmatprep.subr.mxu0 0.0
    %302 = vmatpush1.msra.mxu0 0.0
    %303 = vmatprep.subr.mxu0 0.0
    %304 = vmatpush1.msra.mxu0 0.0
    %305 = vmatprep.subr.mxu0 0.0
    %306 = vmatpush1.msra.mxu0 0.0
    %307 = vmatprep.subr.mxu0 0.0
    %308 = vmatpush1.msra.mxu0 0.0
    %309 = vmatprep.subr.mxu0 0.0
    %310 = vmatpush1.msra.mxu0 0.0
    %311 = vmatprep.subr.mxu0 0.0
    %312 = vmatpush1.msra.mxu0 0.0
    %313 = vmatprep.subr.mxu0 0.0
    %314 = vmatpush1.msra.mxu0 0.0
    %315 = vmatprep.subr.mxu0 0.0
    %316 = vmatpush1.msra.mxu0 0.0
    %317 = vmatprep.subr.mxu0 0.0
    %318 = vmatpush1.msra.mxu0 0.0
    %319 = vmatprep.subr.mxu0 0.0
    %320 = vmatpush1.msra.mxu0 0.0
    %321 = vmatprep.subr.mxu0 0.0
    %322 = vmatpush1.msra.mxu0 0.0
    %323 = vmatprep.subr.mxu0 0.0
    %324 = vmatpush1.msra.mxu0 0.0
    %325 = vmatprep.subr.mxu0 0.0
    %326 = vmatpush1.msra.mxu0 0.0
    %327 = vmatprep.subr.mxu0 0.0
    %328 = vmatpush1.msra.mxu0 0.0
    %329 = vmatprep.subr.mxu0 0.0
    %330 = vmatpush1.msra.mxu0 0.0
    %331 = vmatprep.subr.mxu0 0.0
    %332 = vmatpush1.msra.mxu0 0.0
    %333 = vmatprep.subr.mxu0 0.0
    %334 = vmatpush1.msra.mxu0 0.0
    %335 = vmatprep.subr.mxu0 0.0
    %336 = vmatpush1.msra.mxu0 0.0
    %337 = vmatprep.subr.mxu0 0.0
    %338 = vmatpush1.msra.mxu0 0.0
    %339 = vmatprep.subr.mxu0 0.0
    %340 = vmatpush1.msra.mxu0 0.0
    %341 = vmatprep.subr.mxu0 0.0
    %342 = vmatpush1.msra.mxu0 0.0
    %343 = vmatprep.subr.mxu0 0.0
    %344 = vmatpush1.msra.mxu0 0.0
    %345 = vmatprep.subr.mxu0 0.0
    %346 = vmatpush1.msra.mxu0 0.0
    %347 = vmatprep.subr.mxu0 0.0
    %348 = vmatpush1.msra.mxu0 0.0
    %349 = vmatprep.subr.mxu0 0.0
    %350 = vmatpush1.msra.mxu0 0.0
    %351 = vmatprep.subr.mxu0 0.0
    %352 = vmatpush1.msra.mxu0 0.0
    %353 = vmatprep.subr.mxu0 0.0
    %354 = vmatpush1.msra.mxu0 0.0
    %355 = vmatprep.subr.mxu0 0.0
    %356 = vmatpush1.msra.mxu0 0.0
    %357 = vmatprep.subr.mxu0 0.0
    %358 = vmatpush1.msra.mxu0 0.0
    %359 = vmatprep.subr.mxu0 0.0
    %360 = vmatpush1.msra.mxu0 0.0
    %361 = vmatprep.subr.mxu0 0.0
    %362 = vmatpush1.msra.mxu0 0.0
    %363 = vmatprep.mubr.f32.mxu0 0.0
    %v364 = vand.u32 %v63, 4294901760
    %v365 = vsub.f32 %v63, %v364
    %366 = vmatmul.mubr.f32.gmra.mrb[0].mxu0 %v365
    %v367 = vpop.f32.mrb[0].mxu0
    %v368 = vadd.f32 %v270, %v367
    %v369 = vpop.f32.mrb[0].mxu0
    %370 = vmatprep.mubr.f32.mxu0 0.0
    %v371 = vand.u32 %v66, 4294901760
    %v372 = vsub.f32 %v66, %v371
    %373 = vmatmul.mubr.f32.gmra.mrb[0].mxu0 %v372
    %v374 = vpop.f32.mrb[0].mxu0
    %v375 = vadd.f32 %v276, %v374
    %v376 = vpop.f32.mrb[0].mxu0
    %377 = vmatprep.mubr.f32.mxu0 0.0
    %v378 = vand.u32 %v69, 4294901760
    %v379 = vsub.f32 %v69, %v378
    %380 = vmatmul.mubr.f32.gmra.mrb[0].mxu0 %v379
    %v381 = vpop.f32.mrb[0].mxu0
    %v382 = vadd.f32 %v282, %v381
    %v383 = vpop.f32.mrb[0].mxu0
    %384 = vmatprep.mubr.f32.mxu0 0.0
    %v385 = vand.u32 %v72, 4294901760
    %v386 = vsub.f32 %v72, %v385
    %387 = vmatmul.mubr.f32.gmra.mrb[0].mxu0 %v386
    %v388 = vpop.f32.mrb[0].mxu0
    %v389 = vadd.f32 %v288, %v388
    %v390 = vpop.f32.mrb[0].mxu0
    %391 = vmatprep.mubr.f32.mxu0 0.0
    %v392 = vand.u32 %v75, 4294901760
    %v393 = vsub.f32 %v75, %v392
    %394 = vmatmul.mubr.f32.gmra.mrb[0].mxu0 %v393
    %v395 = vpop.f32.mrb[0].mxu0
    %v396 = vadd.f32 %v294, %v395
    %v397 = vpop.f32.mrb[0].mxu0
    %398 = vdwg.mxu0
    %399 = vmatprep.subr.mxu0 0.0
    %v400 = vand.u32 %v79, 4294901760
    %401 = vmatpush1.msra.mxu0 %v400
    %402 = vmatprep.subr.mxu0 0.0
    %403 = vmatpush1.msra.mxu0 0.0
    %404 = vmatprep.subr.mxu0 0.0
    %405 = vmatpush1.msra.mxu0 0.0
    %406 = vmatprep.subr.mxu0 0.0
    %407 = vmatpush1.msra.mxu0 0.0
    %408 = vmatprep.subr.mxu0 0.0
    %409 = vmatpush1.msra.mxu0 0.0
    %410 = vmatprep.subr.mxu0 0.0
    %411 = vmatpush1.msra.mxu0 0.0
    %412 = vmatprep.subr.mxu0 0.0
    %413 = vmatpush1.msra.mxu0 0.0
    %414 = vmatprep.subr.mxu0 0.0
    %415 = vmatpush1.msra.mxu0 0.0
    %416 = vmatprep.subr.mxu0 0.0
    %417 = vmatpush1.msra.mxu0 0.0
    %418 = vmatprep.subr.mxu0 0.0
    %419 = vmatpush1.msra.mxu0 0.0
    %420 = vmatprep.subr.mxu0 0.0
    %421 = vmatpush1.msra.mxu0 0.0
    %422 = vmatprep.subr.mxu0 0.0
    %423 = vmatpush1.msra.mxu0 0.0
    %424 = vmatprep.subr.mxu0 0.0
    %425 = vmatpush1.msra.mxu0 0.0
    %426 = vmatprep.subr.mxu0 0.0
    %427 = vmatpush1.msra.mxu0 0.0
    %428 = vmatprep.subr.mxu0 0.0
    %429 = vmatpush1.msra.mxu0 0.0
    %430 = vmatprep.subr.mxu0 0.0
    %431 = vmatpush1.msra.mxu0 0.0
    %432 = vmatprep.subr.mxu0 0.0
    %433 = vmatpush1.msra.mxu0 0.0
    %434 = vmatprep.subr.mxu0 0.0
    %435 = vmatpush1.msra.mxu0 0.0
    %436 = vmatprep.subr.mxu0 0.0
    %437 = vmatpush1.msra.mxu0 0.0
    %438 = vmatprep.subr.mxu0 0.0
    %439 = vmatpush1.msra.mxu0 0.0
    %440 = vmatprep.subr.mxu0 0.0
    %441 = vmatpush1.msra.mxu0 0.0
    %442 = vmatprep.subr.mxu0 0.0
    %443 = vmatpush1.msra.mxu0 0.0
    %444 = vmatprep.subr.mxu0 0.0
    %445 = vmatpush1.msra.mxu0 0.0
    %446 = vmatprep.subr.mxu0 0.0
    %447 = vmatpush1.msra.mxu0 0.0
    %448 = vmatprep.subr.mxu0 0.0
    %449 = vmatpush1.msra.mxu0 0.0
    %450 = vmatprep.subr.mxu0 0.0
    %451 = vmatpush1.msra.mxu0 0.0
    %452 = vmatprep.subr.mxu0 0.0
    %453 = vmatpush1.msra.mxu0 0.0
    %454 = vmatprep.subr.mxu0 0.0
    %455 = vmatpush1.msra.mxu0 0.0
    %456 = vmatprep.subr.mxu0 0.0
    %457 = vmatpush1.msra.mxu0 0.0
    %458 = vmatprep.subr.mxu0 0.0
    %459 = vmatpush1.msra.mxu0 0.0
    %460 = vmatprep.subr.mxu0 0.0
    %461 = vmatpush1.msra.mxu0 0.0
    %462 = vmatprep.subr.mxu0 0.0
    %463 = vmatpush1.msra.mxu0 0.0
    %464 = vmatprep.mubr.f32.mxu0 0.0
    %v465 = vand.u32 %v63, 4294901760
    %v466 = vsub.f32 %v63, %v465
    %v467 = vand.u32 %v466, 4294901760
    %468 = vmatmul.mubr.f32.gmra.mrb[0].mxu0 %v467
    %v469 = vpop.f32.mrb[0].mxu0
    %v470 = vadd.f32 %v368, %v469
    %v471 = vpop.f32.mrb[0].mxu0
    %472 = vmatprep.mubr.f32.mxu0 0.0
    %v473 = vand.u32 %v66, 4294901760
    %v474 = vsub.f32 %v66, %v473
    %v475 = vand.u32 %v474, 4294901760
    %476 = vmatmul.mubr.f32.gmra.mrb[0].mxu0 %v475
    %v477 = vpop.f32.mrb[0].mxu0
    %v478 = vadd.f32 %v375, %v477
    %v479 = vpop.f32.mrb[0].mxu0
    %480 = vmatprep.mubr.f32.mxu0 0.0
    %v481 = vand.u32 %v69, 4294901760
    %v482 = vsub.f32 %v69, %v481
    %v483 = vand.u32 %v482, 4294901760
    %484 = vmatmul.mubr.f32.gmra.mrb[0].mxu0 %v483
    %v485 = vpop.f32.mrb[0].mxu0
    %v486 = vadd.f32 %v382, %v485
    %v487 = vpop.f32.mrb[0].mxu0
    %488 = vmatprep.mubr.f32.mxu0 0.0
    %v489 = vand.u32 %v72, 4294901760
    %v490 = vsub.f32 %v72, %v489
    %v491 = vand.u32 %v490, 4294901760
    %492 = vmatmul.mubr.f32.gmra.mrb[0].mxu0 %v491
    %v493 = vpop.f32.mrb[0].mxu0
    %v494 = vadd.f32 %v389, %v493
    %v495 = vpop.f32.mrb[0].mxu0
    %496 = vmatprep.mubr.f32.mxu0 0.0
    %v497 = vand.u32 %v75, 4294901760
    %v498 = vsub.f32 %v75, %v497
    %v499 = vand.u32 %v498, 4294901760
    %500 = vmatmul.mubr.f32.gmra.mrb[0].mxu0 %v499
    %v501 = vpop.f32.mrb[0].mxu0
    %v502 = vadd.f32 %v396, %v501
    %v503 = vpop.f32.mrb[0].mxu0
    %504 = vdwg.mxu0
    %505 = vmatprep.subr.mxu0 0.0
    %v506 = vand.u32 %v79, 4294901760
    %v507 = vsub.f32 %v79, %v506
    %v508 = vand.u32 %v507, 4294901760
    %509 = vmatpush1.msra.mxu0 %v508
    %510 = vmatprep.subr.mxu0 0.0
    %511 = vmatpush1.msra.mxu0 0.0
    %512 = vmatprep.subr.mxu0 0.0
    %513 = vmatpush1.msra.mxu0 0.0
    %514 = vmatprep.subr.mxu0 0.0
    %515 = vmatpush1.msra.mxu0 0.0
    %516 = vmatprep.subr.mxu0 0.0
    %517 = vmatpush1.msra.mxu0 0.0
    %518 = vmatprep.subr.mxu0 0.0
    %519 = vmatpush1.msra.mxu0 0.0
    %520 = vmatprep.subr.mxu0 0.0
    %521 = vmatpush1.msra.mxu0 0.0
    %522 = vmatprep.subr.mxu0 0.0
    %523 = vmatpush1.msra.mxu0 0.0
    %524 = vmatprep.subr.mxu0 0.0
    %525 = vmatpush1.msra.mxu0 0.0
    %526 = vmatprep.subr.mxu0 0.0
    %527 = vmatpush1.msra.mxu0 0.0
    %528 = vmatprep.subr.mxu0 0.0
    %529 = vmatpush1.msra.mxu0 0.0
    %530 = vmatprep.subr.mxu0 0.0
    %531 = vmatpush1.msra.mxu0 0.0
    %532 = vmatprep.subr.mxu0 0.0
    %533 = vmatpush1.msra.mxu0 0.0
    %534 = vmatprep.subr.mxu0 0.0
    %535 = vmatpush1.msra.mxu0 0.0
    %536 = vmatprep.subr.mxu0 0.0
    %537 = vmatpush1.msra.mxu0 0.0
    %538 = vmatprep.subr.mxu0 0.0
    %539 = vmatpush1.msra.mxu0 0.0
    %540 = vmatprep.subr.mxu0 0.0
    %541 = vmatpush1.msra.mxu0 0.0
    %542 = vmatprep.subr.mxu0 0.0
    %543 = vmatpush1.msra.mxu0 0.0
    %544 = vmatprep.subr.mxu0 0.0
    %545 = vmatpush1.msra.mxu0 0.0
    %546 = vmatprep.subr.mxu0 0.0
    %547 = vmatpush1.msra.mxu0 0.0
    %548 = vmatprep.subr.mxu0 0.0
    %549 = vmatpush1.msra.mxu0 0.0
    %550 = vmatprep.subr.mxu0 0.0
    %551 = vmatpush1.msra.mxu0 0.0
    %552 = vmatprep.subr.mxu0 0.0
    %553 = vmatpush1.msra.mxu0 0.0
    %554 = vmatprep.subr.mxu0 0.0
    %555 = vmatpush1.msra.mxu0 0.0
    %556 = vmatprep.subr.mxu0 0.0
    %557 = vmatpush1.msra.mxu0 0.0
    %558 = vmatprep.subr.mxu0 0.0
    %559 = vmatpush1.msra.mxu0 0.0
    %560 = vmatprep.subr.mxu0 0.0
    %561 = vmatpush1.msra.mxu0 0.0
    %562 = vmatprep.subr.mxu0 0.0
    %563 = vmatpush1.msra.mxu0 0.0
    %564 = vmatprep.subr.mxu0 0.0
    %565 = vmatpush1.msra.mxu0 0.0
    %566 = vmatprep.subr.mxu0 0.0
    %567 = vmatpush1.msra.mxu0 0.0
    %568 = vmatprep.subr.mxu0 0.0
    %569 = vmatpush1.msra.mxu0 0.0
    %570 = vmatprep.subr.mxu0 0.0
    %571 = vmatpush1.msra.mxu0 0.0
    %572 = vmatprep.mubr.f32.mxu0 0.0
    %v573 = vand.u32 %v63, 4294901760
    %574 = vmatmul.mubr.f32.gmra.mrb[0].mxu0 %v573
    %v575 = vpop.f32.mrb[0].mxu0
    %v576 = vadd.f32 %v470, %v575
    %v577 = vpop.f32.mrb[0].mxu0
    %578 = vmatprep.mubr.f32.mxu0 0.0
    %v579 = vand.u32 %v66, 4294901760
    %580 = vmatmul.mubr.f32.gmra.mrb[0].mxu0 %v579
    %v581 = vpop.f32.mrb[0].mxu0
    %v582 = vadd.f32 %v478, %v581
    %v583 = vpop.f32.mrb[0].mxu0
    %584 = vmatprep.mubr.f32.mxu0 0.0
    %v585 = vand.u32 %v69, 4294901760
    %586 = vmatmul.mubr.f32.gmra.mrb[0].mxu0 %v585
    %v587 = vpop.f32.mrb[0].mxu0
    %v588 = vadd.f32 %v486, %v587
    %v589 = vpop.f32.mrb[0].mxu0
    %590 = vmatprep.mubr.f32.mxu0 0.0
    %v591 = vand.u32 %v72, 4294901760
    %592 = vmatmul.mubr.f32.gmra.mrb[0].mxu0 %v591
    %v593 = vpop.f32.mrb[0].mxu0
    %v594 = vadd.f32 %v494, %v593
    %v595 = vpop.f32.mrb[0].mxu0
    %596 = vmatprep.mubr.f32.mxu0 0.0
    %v597 = vand.u32 %v75, 4294901760
    %598 = vmatmul.mubr.f32.gmra.mrb[0].mxu0 %v597
    %v599 = vpop.f32.mrb[0].mxu0
    %v600 = vadd.f32 %v502, %v599
    %v601 = vpop.f32.mrb[0].mxu0
    %602 = vdwg.mxu0
    %603 = vmatprep.subr.mxu0 0.0
    %v604 = vand.u32 %v79, 4294901760
    %605 = vmatpush1.msra.mxu0 %v604
    %606 = vmatprep.subr.mxu0 0.0
    %607 = vmatpush1.msra.mxu0 0.0
    %608 = vmatprep.subr.mxu0 0.0
    %609 = vmatpush1.msra.mxu0 0.0
    %610 = vmatprep.subr.mxu0 0.0
    %611 = vmatpush1.msra.mxu0 0.0
    %612 = vmatprep.subr.mxu0 0.0
    %613 = vmatpush1.msra.mxu0 0.0
    %614 = vmatprep.subr.mxu0 0.0
    %615 = vmatpush1.msra.mxu0 0.0
    %616 = vmatprep.subr.mxu0 0.0
    %617 = vmatpush1.msra.mxu0 0.0
    %618 = vmatprep.subr.mxu0 0.0
    %619 = vmatpush1.msra.mxu0 0.0
    %620 = vmatprep.subr.mxu0 0.0
    %621 = vmatpush1.msra.mxu0 0.0
    %622 = vmatprep.subr.mxu0 0.0
    %623 = vmatpush1.msra.mxu0 0.0
    %624 = vmatprep.subr.mxu0 0.0
    %625 = vmatpush1.msra.mxu0 0.0
    %626 = vmatprep.subr.mxu0 0.0
    %627 = vmatpush1.msra.mxu0 0.0
    %628 = vmatprep.subr.mxu0 0.0
    %629 = vmatpush1.msra.mxu0 0.0
    %630 = vmatprep.subr.mxu0 0.0
    %631 = vmatpush1.msra.mxu0 0.0
    %632 = vmatprep.subr.mxu0 0.0
    %633 = vmatpush1.msra.mxu0 0.0
    %634 = vmatprep.subr.mxu0 0.0
    %635 = vmatpush1.msra.mxu0 0.0
    %636 = vmatprep.subr.mxu0 0.0
    %637 = vmatpush1.msra.mxu0 0.0
    %638 = vmatprep.subr.mxu0 0.0
    %639 = vmatpush1.msra.mxu0 0.0
    %640 = vmatprep.subr.mxu0 0.0
    %641 = vmatpush1.msra.mxu0 0.0
    %642 = vmatprep.subr.mxu0 0.0
    %643 = vmatpush1.msra.mxu0 0.0
    %644 = vmatprep.subr.mxu0 0.0
    %645 = vmatpush1.msra.mxu0 0.0
    %646 = vmatprep.subr.mxu0 0.0
    %647 = vmatpush1.msra.mxu0 0.0
    %648 = vmatprep.subr.mxu0 0.0
    %649 = vmatpush1.msra.mxu0 0.0
    %650 = vmatprep.subr.mxu0 0.0
    %651 = vmatpush1.msra.mxu0 0.0
    %652 = vmatprep.subr.mxu0 0.0
    %653 = vmatpush1.msra.mxu0 0.0
    %654 = vmatprep.subr.mxu0 0.0
    %655 = vmatpush1.msra.mxu0 0.0
    %656 = vmatprep.subr.mxu0 0.0
    %657 = vmatpush1.msra.mxu0 0.0
    %658 = vmatprep.subr.mxu0 0.0
    %659 = vmatpush1.msra.mxu0 0.0
    %660 = vmatprep.subr.mxu0 0.0
    %661 = vmatpush1.msra.mxu0 0.0
    %662 = vmatprep.subr.mxu0 0.0
    %663 = vmatpush1.msra.mxu0 0.0
    %664 = vmatprep.subr.mxu0 0.0
    %665 = vmatpush1.msra.mxu0 0.0
    %666 = vmatprep.subr.mxu0 0.0
    %667 = vmatpush1.msra.mxu0 0.0
    %668 = vmatprep.mubr.f32.mxu0 0.0
    %v669 = vand.u32 %v63, 4294901760
    %670 = vmatmul.mubr.f32.gmra.mrb[0].mxu0 %v669
    %v671 = vpop.f32.mrb[0].mxu0
    %v672 = vadd.f32 %v576, %v671
    %v673 = vpop.f32.mrb[0].mxu0
    %674 = vmatprep.mubr.f32.mxu0 0.0
    %v675 = vand.u32 %v66, 4294901760
    %676 = vmatmul.mubr.f32.gmra.mrb[0].mxu0 %v675
    %v677 = vpop.f32.mrb[0].mxu0
    %v678 = vadd.f32 %v582, %v677
    %v679 = vpop.f32.mrb[0].mxu0
    %680 = vmatprep.mubr.f32.mxu0 0.0
    %v681 = vand.u32 %v69, 4294901760
    %682 = vmatmul.mubr.f32.gmra.mrb[0].mxu0 %v681
    %v683 = vpop.f32.mrb[0].mxu0
    %v684 = vadd.f32 %v588, %v683
    %v685 = vpop.f32.mrb[0].mxu0
    %686 = vmatprep.mubr.f32.mxu0 0.0
    %v687 = vand.u32 %v72, 4294901760
    %688 = vmatmul.mubr.f32.gmra.mrb[0].mxu0 %v687
    %v689 = vpop.f32.mrb[0].mxu0
    %v690 = vadd.f32 %v594, %v689
    %v691 = vpop.f32.mrb[0].mxu0
    %692 = vmatprep.mubr.f32.mxu0 0.0
    %v693 = vand.u32 %v75, 4294901760
    %694 = vmatmul.mubr.f32.gmra.mrb[0].mxu0 %v693
    %v695 = vpop.f32.mrb[0].mxu0
    %v696 = vadd.f32 %v600, %v695
    %v697 = vpop.f32.mrb[0].mxu0
    %698 = vdwg.mxu0
    %v699 = vtanh.pop %v672
    %v700 = vtanh.pop %v678
    %v701 = vtanh.pop %v684
    %v702 = vtanh.pop %v690
    %v703 = vtanh.pop %v696
    %v704 = vld [vmem:[#allocation2 + $0x50] sm:$0xff]
    %v705 = vld [vmem:[#allocation2 + $0x58] sm:$0xff]
    %v706 = vld [vmem:[#allocation2 + $0x60] sm:$0xff]
    %v707 = vld [vmem:[#allocation2 + $0x68] sm:$0xff]
    %v708 = vld [vmem:[#allocation2 + $0x70] sm:$0xff]
    %v709 = vld [vmem:[#allocation2 + $0x78] sm:$0xff]
    %v710 = vld [vmem:[#allocation2 + $0x80] sm:$0xff]
    %v711 = vld [vmem:[#allocation2 + $0x88] sm:$0xff]
    %v712 = vld [vmem:[#allocation2 + $0x90] sm:$0xff]
    %v713 = vld [vmem:[#allocation2 + $0x98] sm:$0xff]
    %715 = vset.pattern.permute.xlu0 0
    %716 = vperm.xlu0 %715, %v709
    %v717 = vpop.permute.xlu0 %716
    %720 = vset.pattern.permute.xlu0 0
    %721 = vperm.xlu0 %720, %v710
    %v722 = vpop.permute.xlu0 %721
    %725 = vset.pattern.permute.xlu0 0
    %726 = vperm.xlu0 %725, %v711
    %v727 = vpop.permute.xlu0 %726
    %730 = vset.pattern.permute.xlu0 0
    %731 = vperm.xlu0 %730, %v712
    %v732 = vpop.permute.xlu0 %731
    %735 = vset.pattern.permute.xlu0 0
    %736 = vperm.xlu0 %735, %v713
    %v737 = vpop.permute.xlu0 %736
    %vm739 = vcmask 326656
    %v741 = vsel %vm739, %v704, 0
    %v744 = vsel %vm739, %v705, 0
    %v747 = vsel %vm739, %v706, 0
    %v750 = vsel %vm739, %v707, 0
    %v753 = vsel %vm739, %v708, 0
    %755 = vmatprep.subr.mxu0 0.0
    %v756 = vand.u32 %v699, 4294901760
    %757 = vmatpush1.msra.mxu0 %v756
    %758 = vmatprep.subr.mxu0 0.0
    %v759 = vand.u32 %v700, 4294901760
    %760 = vmatpush1.msra.mxu0 %v759
    %761 = vmatprep.subr.mxu0 0.0
    %v762 = vand.u32 %v701, 4294901760
    %763 = vmatpush1.msra.mxu0 %v762
    %764 = vmatprep.subr.mxu0 0.0
    %v765 = vand.u32 %v702, 4294901760
    %766 = vmatpush1.msra.mxu0 %v765
    %767 = vmatprep.subr.mxu0 0.0
    %v768 = vand.u32 %v703, 4294901760
    %769 = vmatpush1.msra.mxu0 %v768
    %770 = vmatprep.subr.mxu0 0.0
    %771 = vmatpush1.msra.mxu0 0.0
    %772 = vmatprep.subr.mxu0 0.0
    %773 = vmatpush1.msra.mxu0 0.0
    %774 = vmatprep.subr.mxu0 0.0
    %775 = vmatpush1.msra.mxu0 0.0
    %776 = vmatprep.subr.mxu0 0.0
    %777 = vmatpush1.msra.mxu0 0.0
    %778 = vmatprep.subr.mxu0 0.0
    %779 = vmatpush1.msra.mxu0 0.0
    %780 = vmatprep.subr.mxu0 0.0
    %781 = vmatpush1.msra.mxu0 0.0
    %782 = vmatprep.subr.mxu0 0.0
    %783 = vmatpush1.msra.mxu0 0.0
    %784 = vmatprep.subr.mxu0 0.0
    %785 = vmatpush1.msra.mxu0 0.0
    %786 = vmatprep.subr.mxu0 0.0
    %787 = vmatpush1.msra.mxu0 0.0
    %788 = vmatprep.subr.mxu0 0.0
    %789 = vmatpush1.msra.mxu0 0.0
    %790 = vmatprep.subr.mxu0 0.0
    %791 = vmatpush1.msra.mxu0 0.0
    %792 = vmatprep.subr.mxu0 0.0
    %793 = vmatpush1.msra.mxu0 0.0
    %794 = vmatprep.subr.mxu0 0.0
    %795 = vmatpush1.msra.mxu0 0.0
    %796 = vmatprep.subr.mxu0 0.0
    %797 = vmatpush1.msra.mxu0 0.0
    %798 = vmatprep.subr.mxu0 0.0
    %799 = vmatpush1.msra.mxu0 0.0
    %800 = vmatprep.subr.mxu0 0.0
    %801 = vmatpush1.msra.mxu0 0.0
    %802 = vmatprep.subr.mxu0 0.0
    %803 = vmatpush1.msra.mxu0 0.0
    %804 = vmatprep.subr.mxu0 0.0
    %805 = vmatpush1.msra.mxu0 0.0
    %806 = vmatprep.subr.mxu0 0.0
    %807 = vmatpush1.msra.mxu0 0.0
    %808 = vmatprep.subr.mxu0 0.0
    %809 = vmatpush1.msra.mxu0 0.0
    %810 = vmatprep.subr.mxu0 0.0
    %811 = vmatpush1.msra.mxu0 0.0
    %812 = vmatprep.subr.mxu0 0.0
    %813 = vmatpush1.msra.mxu0 0.0
    %814 = vmatprep.subr.mxu0 0.0
    %815 = vmatpush1.msra.mxu0 0.0
    %816 = vmatprep.subr.mxu0 0.0
    %817 = vmatpush1.msra.mxu0 0.0
    %818 = vmatprep.subr.mxu0 0.0
    %819 = vmatpush1.msra.mxu0 0.0
    %820 = vmatprep.subr.mxu0 0.0
    %821 = vmatpush1.msra.mxu0 0.0
    %822 = vmatprep.subr.mxu0 0.0
    %823 = vmatpush1.msra.mxu0 0.0
    %824 = vmatprep.mubr.f32.mxu0 0.0
    %v825 = vand.u32 %v741, 4294901760
    %v826 = vsub.f32 %v741, %v825
    %v827 = vand.u32 %v826, 4294901760
    %v828 = vsub.f32 %v826, %v827
    %v829 = vand.u32 %v828, 4294901760
    %830 = vmatmul.mubr.f32.gmra.mrb[0].mxu0 %v829
    %v831 = vpop.f32.mrb[0].mxu0
    %v832 = vadd.f32 %v717, %v831
    %v833 = vpop.f32.mrb[0].mxu0
    %834 = vmatprep.mubr.f32.mxu0 0.0
    %v835 = vand.u32 %v744, 4294901760
    %v836 = vsub.f32 %v744, %v835
    %v837 = vand.u32 %v836, 4294901760
    %v838 = vsub.f32 %v836, %v837
    %v839 = vand.u32 %v838, 4294901760
    %840 = vmatmul.mubr.f32.gmra.mrb[0].mxu0 %v839
    %v841 = vpop.f32.mrb[0].mxu0
    %v842 = vadd.f32 %v722, %v841
    %v843 = vpop.f32.mrb[0].mxu0
    %844 = vmatprep.mubr.f32.mxu0 0.0
    %v845 = vand.u32 %v747, 4294901760
    %v846 = vsub.f32 %v747, %v845
    %v847 = vand.u32 %v846, 4294901760
    %v848 = vsub.f32 %v846, %v847
    %v849 = vand.u32 %v848, 4294901760
    %850 = vmatmul.mubr.f32.gmra.mrb[0].mxu0 %v849
    %v851 = vpop.f32.mrb[0].mxu0
    %v852 = vadd.f32 %v727, %v851
    %v853 = vpop.f32.mrb[0].mxu0
    %854 = vmatprep.mubr.f32.mxu0 0.0
    %v855 = vand.u32 %v750, 4294901760
    %v856 = vsub.f32 %v750, %v855
    %v857 = vand.u32 %v856, 4294901760
    %v858 = vsub.f32 %v856, %v857
    %v859 = vand.u32 %v858, 4294901760
    %860 = vmatmul.mubr.f32.gmra.mrb[0].mxu0 %v859
    %v861 = vpop.f32.mrb[0].mxu0
    %v862 = vadd.f32 %v732, %v861
    %v863 = vpop.f32.mrb[0].mxu0
    %864 = vmatprep.mubr.f32.mxu0 0.0
    %v865 = vand.u32 %v753, 4294901760
    %v866 = vsub.f32 %v753, %v865
    %v867 = vand.u32 %v866, 4294901760
    %v868 = vsub.f32 %v866, %v867
    %v869 = vand.u32 %v868, 4294901760
    %870 = vmatmul.mubr.f32.gmra.mrb[0].mxu0 %v869
    %v871 = vpop.f32.mrb[0].mxu0
    %v872 = vadd.f32 %v737, %v871
    %v873 = vpop.f32.mrb[0].mxu0
    %874 = vdwg.mxu0
    %875 = vmatprep.subr.mxu0 0.0
    %v876 = vand.u32 %v699, 4294901760
    %v877 = vsub.f32 %v699, %v876
    %v878 = vand.u32 %v877, 4294901760
    %v879 = vsub.f32 %v877, %v878
    %v880 = vand.u32 %v879, 4294901760
    %881 = vmatpush1.msra.mxu0 %v880
    %882 = vmatprep.subr.mxu0 0.0
    %v883 = vand.u32 %v700, 4294901760
    %v884 = vsub.f32 %v700, %v883
    %v885 = vand.u32 %v884, 4294901760
    %v886 = vsub.f32 %v884, %v885
    %v887 = vand.u32 %v886, 4294901760
    %888 = vmatpush1.msra.mxu0 %v887
    %889 = vmatprep.subr.mxu0 0.0
    %v890 = vand.u32 %v701, 4294901760
    %v891 = vsub.f32 %v701, %v890
    %v892 = vand.u32 %v891, 4294901760
    %v893 = vsub.f32 %v891, %v892
    %v894 = vand.u32 %v893, 4294901760
    %895 = vmatpush1.msra.mxu0 %v894
    %896 = vmatprep.subr.mxu0 0.0
    %v897 = vand.u32 %v702, 4294901760
    %v898 = vsub.f32 %v702, %v897
    %v899 = vand.u32 %v898, 4294901760
    %v900 = vsub.f32 %v898, %v899
    %v901 = vand.u32 %v900, 4294901760
    %902 = vmatpush1.msra.mxu0 %v901
    %903 = vmatprep.subr.mxu0 0.0
    %v904 = vand.u32 %v703, 4294901760
    %v905 = vsub.f32 %v703, %v904
    %v906 = vand.u32 %v905, 4294901760
    %v907 = vsub.f32 %v905, %v906
    %v908 = vand.u32 %v907, 4294901760
    %909 = vmatpush1.msra.mxu0 %v908
    %910 = vmatprep.subr.mxu0 0.0
    %911 = vmatpush1.msra.mxu0 0.0
    %912 = vmatprep.subr.mxu0 0.0
    %913 = vmatpush1.msra.mxu0 0.0
    %914 = vmatprep.subr.mxu0 0.0
    %915 = vmatpush1.msra.mxu0 0.0
    %916 = vmatprep.subr.mxu0 0.0
    %917 = vmatpush1.msra.mxu0 0.0
    %918 = vmatprep.subr.mxu0 0.0
    %919 = vmatpush1.msra.mxu0 0.0
    %920 = vmatprep.subr.mxu0 0.0
    %921 = vmatpush1.msra.mxu0 0.0
    %922 = vmatprep.subr.mxu0 0.0
    %923 = vmatpush1.msra.mxu0 0.0
    %924 = vmatprep.subr.mxu0 0.0
    %925 = vmatpush1.msra.mxu0 0.0
    %926 = vmatprep.subr.mxu0 0.0
    %927 = vmatpush1.msra.mxu0 0.0
    %928 = vmatprep.subr.mxu0 0.0
    %929 = vmatpush1.msra.mxu0 0.0
    %930 = vmatprep.subr.mxu0 0.0
    %931 = vmatpush1.msra.mxu0 0.0
    %932 = vmatprep.subr.mxu0 0.0
    %933 = vmatpush1.msra.mxu0 0.0
    %934 = vmatprep.subr.mxu0 0.0
    %935 = vmatpush1.msra.mxu0 0.0
    %936 = vmatprep.subr.mxu0 0.0
    %937 = vmatpush1.msra.mxu0 0.0
    %938 = vmatprep.subr.mxu0 0.0
    %939 = vmatpush1.msra.mxu0 0.0
    %940 = vmatprep.subr.mxu0 0.0
    %941 = vmatpush1.msra.mxu0 0.0
    %942 = vmatprep.subr.mxu0 0.0
    %943 = vmatpush1.msra.mxu0 0.0
    %944 = vmatprep.subr.mxu0 0.0
    %945 = vmatpush1.msra.mxu0 0.0
    %946 = vmatprep.subr.mxu0 0.0
    %947 = vmatpush1.msra.mxu0 0.0
    %948 = vmatprep.subr.mxu0 0.0
    %949 = vmatpush1.msra.mxu0 0.0
    %950 = vmatprep.subr.mxu0 0.0
    %951 = vmatpush1.msra.mxu0 0.0
    %952 = vmatprep.subr.mxu0 0.0
    %953 = vmatpush1.msra.mxu0 0.0
    %954 = vmatprep.subr.mxu0 0.0
    %955 = vmatpush1.msra.mxu0 0.0
    %956 = vmatprep.subr.mxu0 0.0
    %957 = vmatpush1.msra.mxu0 0.0
    %958 = vmatprep.subr.mxu0 0.0
    %959 = vmatpush1.msra.mxu0 0.0
    %960 = vmatprep.subr.mxu0 0.0
    %961 = vmatpush1.msra.mxu0 0.0
    %962 = vmatprep.subr.mxu0 0.0
    %963 = vmatpush1.msra.mxu0 0.0
    %964 = vmatprep.mubr.f32.mxu0 0.0
    %v965 = vand.u32 %v741, 4294901760
    %966 = vmatmul.mubr.f32.gmra.mrb[0].mxu0 %v965
    %v967 = vpop.f32.mrb[0].mxu0
    %v968 = vadd.f32 %v832, %v967
    %v969 = vpop.f32.mrb[0].mxu0
    %970 = vmatprep.mubr.f32.mxu0 0.0
    %v971 = vand.u32 %v744, 4294901760
    %972 = vmatmul.mubr.f32.gmra.mrb[0].mxu0 %v971
    %v973 = vpop.f32.mrb[0].mxu0
    %v974 = vadd.f32 %v842, %v973
    %v975 = vpop.f32.mrb[0].mxu0
    %976 = vmatprep.mubr.f32.mxu0 0.0
    %v977 = vand.u32 %v747, 4294901760
    %978 = vmatmul.mubr.f32.gmra.mrb[0].mxu0 %v977
    %v979 = vpop.f32.mrb[0].mxu0
    %v980 = vadd.f32 %v852, %v979
    %v981 = vpop.f32.mrb[0].mxu0
    %982 = vmatprep.mubr.f32.mxu0 0.0
    %v983 = vand.u32 %v750, 4294901760
    %984 = vmatmul.mubr.f32.gmra.mrb[0].mxu0 %v983
    %v985 = vpop.f32.mrb[0].mxu0
    %v986 = vadd.f32 %v862, %v985
    %v987 = vpop.f32.mrb[0].mxu0
    %988 = vmatprep.mubr.f32.mxu0 0.0
    %v989 = vand.u32 %v753, 4294901760
    %990 = vmatmul.mubr.f32.gmra.mrb[0].mxu0 %v989
    %v991 = vpop.f32.mrb[0].mxu0
    %v992 = vadd.f32 %v872, %v991
    %v993 = vpop.f32.mrb[0].mxu0
    %994 = vdwg.mxu0
    %995 = vmatprep.subr.mxu0 0.0
    %v996 = vand.u32 %v699, 4294901760
    %v997 = vsub.f32 %v699, %v996
    %998 = vmatpush1.msra.mxu0 %v997
    %999 = vmatprep.subr.mxu0 0.0
    %v1000 = vand.u32 %v700, 4294901760
    %v1001 = vsub.f32 %v700, %v1000
    %1002 = vmatpush1.msra.mxu0 %v1001
    %1003 = vmatprep.subr.mxu0 0.0
    %v1004 = vand.u32 %v701, 4294901760
    %v1005 = vsub.f32 %v701, %v1004
    %1006 = vmatpush1.msra.mxu0 %v1005
    %1007 = vmatprep.subr.mxu0 0.0
    %v1008 = vand.u32 %v702, 4294901760
    %v1009 = vsub.f32 %v702, %v1008
    %1010 = vmatpush1.msra.mxu0 %v1009
    %1011 = vmatprep.subr.mxu0 0.0
    %v1012 = vand.u32 %v703, 4294901760
    %v1013 = vsub.f32 %v703, %v1012
    %1014 = vmatpush1.msra.mxu0 %v1013
    %1015 = vmatprep.subr.mxu0 0.0
    %1016 = vmatpush1.msra.mxu0 0.0
    %1017 = vmatprep.subr.mxu0 0.0
    %1018 = vmatpush1.msra.mxu0 0.0
    %1019 = vmatprep.subr.mxu0 0.0
    %1020 = vmatpush1.msra.mxu0 0.0
    %1021 = vmatprep.subr.mxu0 0.0
    %1022 = vmatpush1.msra.mxu0 0.0
    %1023 = vmatprep.subr.mxu0 0.0
    %1024 = vmatpush1.msra.mxu0 0.0
    %1025 = vmatprep.subr.mxu0 0.0
    %1026 = vmatpush1.msra.mxu0 0.0
    %1027 = vmatprep.subr.mxu0 0.0
    %1028 = vmatpush1.msra.mxu0 0.0
    %1029 = vmatprep.subr.mxu0 0.0
    %1030 = vmatpush1.msra.mxu0 0.0
    %1031 = vmatprep.subr.mxu0 0.0
    %1032 = vmatpush1.msra.mxu0 0.0
    %1033 = vmatprep.subr.mxu0 0.0
    %1034 = vmatpush1.msra.mxu0 0.0
    %1035 = vmatprep.subr.mxu0 0.0
    %1036 = vmatpush1.msra.mxu0 0.0
    %1037 = vmatprep.subr.mxu0 0.0
    %1038 = vmatpush1.msra.mxu0 0.0
    %1039 = vmatprep.subr.mxu0 0.0
    %1040 = vmatpush1.msra.mxu0 0.0
    %1041 = vmatprep.subr.mxu0 0.0
    %1042 = vmatpush1.msra.mxu0 0.0
    %1043 = vmatprep.subr.mxu0 0.0
    %1044 = vmatpush1.msra.mxu0 0.0
    %1045 = vmatprep.subr.mxu0 0.0
    %1046 = vmatpush1.msra.mxu0 0.0
    %1047 = vmatprep.subr.mxu0 0.0
    %1048 = vmatpush1.msra.mxu0 0.0
    %1049 = vmatprep.subr.mxu0 0.0
    %1050 = vmatpush1.msra.mxu0 0.0
    %1051 = vmatprep.subr.mxu0 0.0
    %1052 = vmatpush1.msra.mxu0 0.0
    %1053 = vmatprep.subr.mxu0 0.0
    %1054 = vmatpush1.msra.mxu0 0.0
    %1055 = vmatprep.subr.mxu0 0.0
    %1056 = vmatpush1.msra.mxu0 0.0
    %1057 = vmatprep.subr.mxu0 0.0
    %1058 = vmatpush1.msra.mxu0 0.0
    %1059 = vmatprep.subr.mxu0 0.0
    %1060 = vmatpush1.msra.mxu0 0.0
    %1061 = vmatprep.subr.mxu0 0.0
    %1062 = vmatpush1.msra.mxu0 0.0
    %1063 = vmatprep.subr.mxu0 0.0
    %1064 = vmatpush1.msra.mxu0 0.0
    %1065 = vmatprep.subr.mxu0 0.0
    %1066 = vmatpush1.msra.mxu0 0.0
    %1067 = vmatprep.subr.mxu0 0.0
    %1068 = vmatpush1.msra.mxu0 0.0
    %1069 = vmatprep.mubr.f32.mxu0 0.0
    %v1070 = vand.u32 %v741, 4294901760
    %v1071 = vsub.f32 %v741, %v1070
    %1072 = vmatmul.mubr.f32.gmra.mrb[0].mxu0 %v1071
    %v1073 = vpop.f32.mrb[0].mxu0
    %v1074 = vadd.f32 %v968, %v1073
    %v1075 = vpop.f32.mrb[0].mxu0
    %1076 = vmatprep.mubr.f32.mxu0 0.0
    %v1077 = vand.u32 %v744, 4294901760
    %v1078 = vsub.f32 %v744, %v1077
    %1079 = vmatmul.mubr.f32.gmra.mrb[0].mxu0 %v1078
    %v1080 = vpop.f32.mrb[0].mxu0
    %v1081 = vadd.f32 %v974, %v1080
    %v1082 = vpop.f32.mrb[0].mxu0
    %1083 = vmatprep.mubr.f32.mxu0 0.0
    %v1084 = vand.u32 %v747, 4294901760
    %v1085 = vsub.f32 %v747, %v1084
    %1086 = vmatmul.mubr.f32.gmra.mrb[0].mxu0 %v1085
    %v1087 = vpop.f32.mrb[0].mxu0
    %v1088 = vadd.f32 %v980, %v1087
    %v1089 = vpop.f32.mrb[0].mxu0
    %1090 = vmatprep.mubr.f32.mxu0 0.0
    %v1091 = vand.u32 %v750, 4294901760
    %v1092 = vsub.f32 %v750, %v1091
    %1093 = vmatmul.mubr.f32.gmra.mrb[0].mxu0 %v1092
    %v1094 = vpop.f32.mrb[0].mxu0
    %v1095 = vadd.f32 %v986, %v1094
    %v1096 = vpop.f32.mrb[0].mxu0
    %1097 = vmatprep.mubr.f32.mxu0 0.0
    %v1098 = vand.u32 %v753, 4294901760
    %v1099 = vsub.f32 %v753, %v1098
    %1100 = vmatmul.mubr.f32.gmra.mrb[0].mxu0 %v1099
    %v1101 = vpop.f32.mrb[0].mxu0
    %v1102 = vadd.f32 %v992, %v1101
    %v1103 = vpop.f32.mrb[0].mxu0
    %1104 = vdwg.mxu0
    %1105 = vmatprep.subr.mxu0 0.0
    %v1106 = vand.u32 %v699, 4294901760
    %1107 = vmatpush1.msra.mxu0 %v1106
    %1108 = vmatprep.subr.mxu0 0.0
    %v1109 = vand.u32 %v700, 4294901760
    %1110 = vmatpush1.msra.mxu0 %v1109
    %1111 = vmatprep.subr.mxu0 0.0
    %v1112 = vand.u32 %v701, 4294901760
    %1113 = vmatpush1.msra.mxu0 %v1112
    %1114 = vmatprep.subr.mxu0 0.0
    %v1115 = vand.u32 %v702, 4294901760
    %1116 = vmatpush1.msra.mxu0 %v1115
    %1117 = vmatprep.subr.mxu0 0.0
    %v1118 = vand.u32 %v703, 4294901760
    %1119 = vmatpush1.msra.mxu0 %v1118
    %1120 = vmatprep.subr.mxu0 0.0
    %1121 = vmatpush1.msra.mxu0 0.0
    %1122 = vmatprep.subr.mxu0 0.0
    %1123 = vmatpush1.msra.mxu0 0.0
    %1124 = vmatprep.subr.mxu0 0.0
    %1125 = vmatpush1.msra.mxu0 0.0
    %1126 = vmatprep.subr.mxu0 0.0
    %1127 = vmatpush1.msra.mxu0 0.0
    %1128 = vmatprep.subr.mxu0 0.0
    %1129 = vmatpush1.msra.mxu0 0.0
    %1130 = vmatprep.subr.mxu0 0.0
    %1131 = vmatpush1.msra.mxu0 0.0
    %1132 = vmatprep.subr.mxu0 0.0
    %1133 = vmatpush1.msra.mxu0 0.0
    %1134 = vmatprep.subr.mxu0 0.0
    %1135 = vmatpush1.msra.mxu0 0.0
    %1136 = vmatprep.subr.mxu0 0.0
    %1137 = vmatpush1.msra.mxu0 0.0
    %1138 = vmatprep.subr.mxu0 0.0
    %1139 = vmatpush1.msra.mxu0 0.0
    %1140 = vmatprep.subr.mxu0 0.0
    %1141 = vmatpush1.msra.mxu0 0.0
    %1142 = vmatprep.subr.mxu0 0.0
    %1143 = vmatpush1.msra.mxu0 0.0
    %1144 = vmatprep.subr.mxu0 0.0
    %1145 = vmatpush1.msra.mxu0 0.0
    %1146 = vmatprep.subr.mxu0 0.0
    %1147 = vmatpush1.msra.mxu0 0.0
    %1148 = vmatprep.subr.mxu0 0.0
    %1149 = vmatpush1.msra.mxu0 0.0
    %1150 = vmatprep.subr.mxu0 0.0
    %1151 = vmatpush1.msra.mxu0 0.0
    %1152 = vmatprep.subr.mxu0 0.0
    %1153 = vmatpush1.msra.mxu0 0.0
    %1154 = vmatprep.subr.mxu0 0.0
    %1155 = vmatpush1.msra.mxu0 0.0
    %1156 = vmatprep.subr.mxu0 0.0
    %1157 = vmatpush1.msra.mxu0 0.0
    %1158 = vmatprep.subr.mxu0 0.0
    %1159 = vmatpush1.msra.mxu0 0.0
    %1160 = vmatprep.subr.mxu0 0.0
    %1161 = vmatpush1.msra.mxu0 0.0
    %1162 = vmatprep.subr.mxu0 0.0
    %1163 = vmatpush1.msra.mxu0 0.0
    %1164 = vmatprep.subr.mxu0 0.0
    %1165 = vmatpush1.msra.mxu0 0.0
    %1166 = vmatprep.subr.mxu0 0.0
    %1167 = vmatpush1.msra.mxu0 0.0
    %1168 = vmatprep.subr.mxu0 0.0
    %1169 = vmatpush1.msra.mxu0 0.0
    %1170 = vmatprep.subr.mxu0 0.0
    %1171 = vmatpush1.msra.mxu0 0.0
    %1172 = vmatprep.subr.mxu0 0.0
    %1173 = vmatpush1.msra.mxu0 0.0
    %1174 = vmatprep.mubr.f32.mxu0 0.0
    %v1175 = vand.u32 %v741, 4294901760
    %v1176 = vsub.f32 %v741, %v1175
    %v1177 = vand.u32 %v1176, 4294901760
    %1178 = vmatmul.mubr.f32.gmra.mrb[0].mxu0 %v1177
    %v1179 = vpop.f32.mrb[0].mxu0
    %v1180 = vadd.f32 %v1074, %v1179
    %v1181 = vpop.f32.mrb[0].mxu0
    %1182 = vmatprep.mubr.f32.mxu0 0.0
    %v1183 = vand.u32 %v744, 4294901760
    %v1184 = vsub.f32 %v744, %v1183
    %v1185 = vand.u32 %v1184, 4294901760
    %1186 = vmatmul.mubr.f32.gmra.mrb[0].mxu0 %v1185
    %v1187 = vpop.f32.mrb[0].mxu0
    %v1188 = vadd.f32 %v1081, %v1187
    %v1189 = vpop.f32.mrb[0].mxu0
    %1190 = vmatprep.mubr.f32.mxu0 0.0
    %v1191 = vand.u32 %v747, 4294901760
    %v1192 = vsub.f32 %v747, %v1191
    %v1193 = vand.u32 %v1192, 4294901760
    %1194 = vmatmul.mubr.f32.gmra.mrb[0].mxu0 %v1193
    %v1195 = vpop.f32.mrb[0].mxu0
    %v1196 = vadd.f32 %v1088, %v1195
    %v1197 = vpop.f32.mrb[0].mxu0
    %1198 = vmatprep.mubr.f32.mxu0 0.0
    %v1199 = vand.u32 %v750, 4294901760
    %v1200 = vsub.f32 %v750, %v1199
    %v1201 = vand.u32 %v1200, 4294901760
    %1202 = vmatmul.mubr.f32.gmra.mrb[0].mxu0 %v1201
    %v1203 = vpop.f32.mrb[0].mxu0
    %v1204 = vadd.f32 %v1095, %v1203
    %v1205 = vpop.f32.mrb[0].mxu0
    %1206 = vmatprep.mubr.f32.mxu0 0.0
    %v1207 = vand.u32 %v753, 4294901760
    %v1208 = vsub.f32 %v753, %v1207
    %v1209 = vand.u32 %v1208, 4294901760
    %1210 = vmatmul.mubr.f32.gmra.mrb[0].mxu0 %v1209
    %v1211 = vpop.f32.mrb[0].mxu0
    %v1212 = vadd.f32 %v1102, %v1211
    %v1213 = vpop.f32.mrb[0].mxu0
    %1214 = vdwg.mxu0
    %1215 = vmatprep.subr.mxu0 0.0
    %v1216 = vand.u32 %v699, 4294901760
    %v1217 = vsub.f32 %v699, %v1216
    %v1218 = vand.u32 %v1217, 4294901760
    %1219 = vmatpush1.msra.mxu0 %v1218
    %1220 = vmatprep.subr.mxu0 0.0
    %v1221 = vand.u32 %v700, 4294901760
    %v1222 = vsub.f32 %v700, %v1221
    %v1223 = vand.u32 %v1222, 4294901760
    %1224 = vmatpush1.msra.mxu0 %v1223
    %1225 = vmatprep.subr.mxu0 0.0
    %v1226 = vand.u32 %v701, 4294901760
    %v1227 = vsub.f32 %v701, %v1226
    %v1228 = vand.u32 %v1227, 4294901760
    %1229 = vmatpush1.msra.mxu0 %v1228
    %1230 = vmatprep.subr.mxu0 0.0
    %v1231 = vand.u32 %v702, 4294901760
    %v1232 = vsub.f32 %v702, %v1231
    %v1233 = vand.u32 %v1232, 4294901760
    %1234 = vmatpush1.msra.mxu0 %v1233
    %1235 = vmatprep.subr.mxu0 0.0
    %v1236 = vand.u32 %v703, 4294901760
    %v1237 = vsub.f32 %v703, %v1236
    %v1238 = vand.u32 %v1237, 4294901760
    %1239 = vmatpush1.msra.mxu0 %v1238
    %1240 = vmatprep.subr.mxu0 0.0
    %1241 = vmatpush1.msra.mxu0 0.0
    %1242 = vmatprep.subr.mxu0 0.0
    %1243 = vmatpush1.msra.mxu0 0.0
    %1244 = vmatprep.subr.mxu0 0.0
    %1245 = vmatpush1.msra.mxu0 0.0
    %1246 = vmatprep.subr.mxu0 0.0
    %1247 = vmatpush1.msra.mxu0 0.0
    %1248 = vmatprep.subr.mxu0 0.0
    %1249 = vmatpush1.msra.mxu0 0.0
    %1250 = vmatprep.subr.mxu0 0.0
    %1251 = vmatpush1.msra.mxu0 0.0
    %1252 = vmatprep.subr.mxu0 0.0
    %1253 = vmatpush1.msra.mxu0 0.0
    %1254 = vmatprep.subr.mxu0 0.0
    %1255 = vmatpush1.msra.mxu0 0.0
    %1256 = vmatprep.subr.mxu0 0.0
    %1257 = vmatpush1.msra.mxu0 0.0
    %1258 = vmatprep.subr.mxu0 0.0
    %1259 = vmatpush1.msra.mxu0 0.0
    %1260 = vmatprep.subr.mxu0 0.0
    %1261 = vmatpush1.msra.mxu0 0.0
    %1262 = vmatprep.subr.mxu0 0.0
    %1263 = vmatpush1.msra.mxu0 0.0
    %1264 = vmatprep.subr.mxu0 0.0
    %1265 = vmatpush1.msra.mxu0 0.0
    %1266 = vmatprep.subr.mxu0 0.0
    %1267 = vmatpush1.msra.mxu0 0.0
    %1268 = vmatprep.subr.mxu0 0.0
    %1269 = vmatpush1.msra.mxu0 0.0
    %1270 = vmatprep.subr.mxu0 0.0
    %1271 = vmatpush1.msra.mxu0 0.0
    %1272 = vmatprep.subr.mxu0 0.0
    %1273 = vmatpush1.msra.mxu0 0.0
    %1274 = vmatprep.subr.mxu0 0.0
    %1275 = vmatpush1.msra.mxu0 0.0
    %1276 = vmatprep.subr.mxu0 0.0
    %1277 = vmatpush1.msra.mxu0 0.0
    %1278 = vmatprep.subr.mxu0 0.0
    %1279 = vmatpush1.msra.mxu0 0.0
    %1280 = vmatprep.subr.mxu0 0.0
    %1281 = vmatpush1.msra.mxu0 0.0
    %1282 = vmatprep.subr.mxu0 0.0
    %1283 = vmatpush1.msra.mxu0 0.0
    %1284 = vmatprep.subr.mxu0 0.0
    %1285 = vmatpush1.msra.mxu0 0.0
    %1286 = vmatprep.subr.mxu0 0.0
    %1287 = vmatpush1.msra.mxu0 0.0
    %1288 = vmatprep.subr.mxu0 0.0
    %1289 = vmatpush1.msra.mxu0 0.0
    %1290 = vmatprep.subr.mxu0 0.0
    %1291 = vmatpush1.msra.mxu0 0.0
    %1292 = vmatprep.subr.mxu0 0.0
    %1293 = vmatpush1.msra.mxu0 0.0
    %1294 = vmatprep.mubr.f32.mxu0 0.0
    %v1295 = vand.u32 %v741, 4294901760
    %1296 = vmatmul.mubr.f32.gmra.mrb[0].mxu0 %v1295
    %v1297 = vpop.f32.mrb[0].mxu0
    %v1298 = vadd.f32 %v1180, %v1297
    %v1299 = vpop.f32.mrb[0].mxu0
    %1300 = vmatprep.mubr.f32.mxu0 0.0
    %v1301 = vand.u32 %v744, 4294901760
    %1302 = vmatmul.mubr.f32.gmra.mrb[0].mxu0 %v1301
    %v1303 = vpop.f32.mrb[0].mxu0
    %v1304 = vadd.f32 %v1188, %v1303
    %v1305 = vpop.f32.mrb[0].mxu0
    %1306 = vmatprep.mubr.f32.mxu0 0.0
    %v1307 = vand.u32 %v747, 4294901760
    %1308 = vmatmul.mubr.f32.gmra.mrb[0].mxu0 %v1307
    %v1309 = vpop.f32.mrb[0].mxu0
    %v1310 = vadd.f32 %v1196, %v1309
    %v1311 = vpop.f32.mrb[0].mxu0
    %1312 = vmatprep.mubr.f32.mxu0 0.0
    %v1313 = vand.u32 %v750, 4294901760
    %1314 = vmatmul.mubr.f32.gmra.mrb[0].mxu0 %v1313
    %v1315 = vpop.f32.mrb[0].mxu0
    %v1316 = vadd.f32 %v1204, %v1315
    %v1317 = vpop.f32.mrb[0].mxu0
    %1318 = vmatprep.mubr.f32.mxu0 0.0
    %v1319 = vand.u32 %v753, 4294901760
    %1320 = vmatmul.mubr.f32.gmra.mrb[0].mxu0 %v1319
    %v1321 = vpop.f32.mrb[0].mxu0
    %v1322 = vadd.f32 %v1212, %v1321
    %v1323 = vpop.f32.mrb[0].mxu0
    %1324 = vdwg.mxu0
    %1325 = vmatprep.subr.mxu0 0.0
    %v1326 = vand.u32 %v699, 4294901760
    %1327 = vmatpush1.msra.mxu0 %v1326
    %1328 = vmatprep.subr.mxu0 0.0
    %v1329 = vand.u32 %v700, 4294901760
    %1330 = vmatpush1.msra.mxu0 %v1329
    %1331 = vmatprep.subr.mxu0 0.0
    %v1332 = vand.u32 %v701, 4294901760
    %1333 = vmatpush1.msra.mxu0 %v1332
    %1334 = vmatprep.subr.mxu0 0.0
    %v1335 = vand.u32 %v702, 4294901760
    %1336 = vmatpush1.msra.mxu0 %v1335
    %1337 = vmatprep.subr.mxu0 0.0
    %v1338 = vand.u32 %v703, 4294901760
    %1339 = vmatpush1.msra.mxu0 %v1338
    %1340 = vmatprep.subr.mxu0 0.0
    %1341 = vmatpush1.msra.mxu0 0.0
    %1342 = vmatprep.subr.mxu0 0.0
    %1343 = vmatpush1.msra.mxu0 0.0
    %1344 = vmatprep.subr.mxu0 0.0
    %1345 = vmatpush1.msra.mxu0 0.0
    %1346 = vmatprep.subr.mxu0 0.0
    %1347 = vmatpush1.msra.mxu0 0.0
    %1348 = vmatprep.subr.mxu0 0.0
    %1349 = vmatpush1.msra.mxu0 0.0
    %1350 = vmatprep.subr.mxu0 0.0
    %1351 = vmatpush1.msra.mxu0 0.0
    %1352 = vmatprep.subr.mxu0 0.0
    %1353 = vmatpush1.msra.mxu0 0.0
    %1354 = vmatprep.subr.mxu0 0.0
    %1355 = vmatpush1.msra.mxu0 0.0
    %1356 = vmatprep.subr.mxu0 0.0
    %1357 = vmatpush1.msra.mxu0 0.0
    %1358 = vmatprep.subr.mxu0 0.0
    %1359 = vmatpush1.msra.mxu0 0.0
    %1360 = vmatprep.subr.mxu0 0.0
    %1361 = vmatpush1.msra.mxu0 0.0
    %1362 = vmatprep.subr.mxu0 0.0
    %1363 = vmatpush1.msra.mxu0 0.0
    %1364 = vmatprep.subr.mxu0 0.0
    %1365 = vmatpush1.msra.mxu0 0.0
    %1366 = vmatprep.subr.mxu0 0.0
    %1367 = vmatpush1.msra.mxu0 0.0
    %1368 = vmatprep.subr.mxu0 0.0
    %1369 = vmatpush1.msra.mxu0 0.0
    %1370 = vmatprep.subr.mxu0 0.0
    %1371 = vmatpush1.msra.mxu0 0.0
    %1372 = vmatprep.subr.mxu0 0.0
    %1373 = vmatpush1.msra.mxu0 0.0
    %1374 = vmatprep.subr.mxu0 0.0
    %1375 = vmatpush1.msra.mxu0 0.0
    %1376 = vmatprep.subr.mxu0 0.0
    %1377 = vmatpush1.msra.mxu0 0.0
    %1378 = vmatprep.subr.mxu0 0.0
    %1379 = vmatpush1.msra.mxu0 0.0
    %1380 = vmatprep.subr.mxu0 0.0
    %1381 = vmatpush1.msra.mxu0 0.0
    %1382 = vmatprep.subr.mxu0 0.0
    %1383 = vmatpush1.msra.mxu0 0.0
    %1384 = vmatprep.subr.mxu0 0.0
    %1385 = vmatpush1.msra.mxu0 0.0
    %1386 = vmatprep.subr.mxu0 0.0
    %1387 = vmatpush1.msra.mxu0 0.0
    %1388 = vmatprep.subr.mxu0 0.0
    %1389 = vmatpush1.msra.mxu0 0.0
    %1390 = vmatprep.subr.mxu0 0.0
    %1391 = vmatpush1.msra.mxu0 0.0
    %1392 = vmatprep.subr.mxu0 0.0
    %1393 = vmatpush1.msra.mxu0 0.0
    %1394 = vmatprep.mubr.f32.mxu0 0.0
    %v1395 = vand.u32 %v741, 4294901760
    %1396 = vmatmul.mubr.f32.gmra.mrb[0].mxu0 %v1395
    %v1397 = vpop.f32.mrb[0].mxu0
    %v1398 = vadd.f32 %v1298, %v1397
    %v1399 = vpop.f32.mrb[0].mxu0
    %1400 = vmatprep.mubr.f32.mxu0 0.0
    %v1401 = vand.u32 %v744, 4294901760
    %1402 = vmatmul.mubr.f32.gmra.mrb[0].mxu0 %v1401
    %v1403 = vpop.f32.mrb[0].mxu0
    %v1404 = vadd.f32 %v1304, %v1403
    %v1405 = vpop.f32.mrb[0].mxu0
    %1406 = vmatprep.mubr.f32.mxu0 0.0
    %v1407 = vand.u32 %v747, 4294901760
    %1408 = vmatmul.mubr.f32.gmra.mrb[0].mxu0 %v1407
    %v1409 = vpop.f32.mrb[0].mxu0
    %v1410 = vadd.f32 %v1310, %v1409
    %v1411 = vpop.f32.mrb[0].mxu0
    %1412 = vmatprep.mubr.f32.mxu0 0.0
    %v1413 = vand.u32 %v750, 4294901760
    %1414 = vmatmul.mubr.f32.gmra.mrb[0].mxu0 %v1413
    %v1415 = vpop.f32.mrb[0].mxu0
    %v1416 = vadd.f32 %v1316, %v1415
    %v1417 = vpop.f32.mrb[0].mxu0
    %1418 = vmatprep.mubr.f32.mxu0 0.0
    %v1419 = vand.u32 %v753, 4294901760
    %1420 = vmatmul.mubr.f32.gmra.mrb[0].mxu0 %v1419
    %v1421 = vpop.f32.mrb[0].mxu0
    %v1422 = vadd.f32 %v1322, %v1421
    %v1423 = vpop.f32.mrb[0].mxu0
    %1424 = vdwg.mxu0
    %v1425 = vtanh.pop %v1398
    %v1426 = vtanh.pop %v1404
    %v1427 = vtanh.pop %v1410
    %v1428 = vtanh.pop %v1416
    %v1429 = vtanh.pop %v1422
    %v1430 = vld [vmem:[#allocation2 + $0xa0] sm:$0xff]
    %v1431 = vld [vmem:[#allocation2 + $0xa8] sm:$0xff]
    %v1432 = vld [vmem:[#allocation2 + $0xb0] sm:$0xf]
    %v1433 = vld [vmem:[#allocation2 + $0xb8] sm:$0xff]
    %v1434 = vld [vmem:[#allocation2 + $0xc0] sm:$0xff]
    %v1435 = vld [vmem:[#allocation2 + $0xc8] sm:$0xf]
    %1437 = vset.pattern.permute.xlu0 0
    %1438 = vperm.xlu0 %1437, %v1433
    %v1439 = vpop.permute.xlu0 %1438
    %1442 = vset.pattern.permute.xlu0 0
    %1443 = vperm.xlu0 %1442, %v1434
    %v1444 = vpop.permute.xlu0 %1443
    %1447 = vset.pattern.permute.xlu0 0
    %1448 = vperm.xlu0 %1447, %v1435
    %v1449 = vpop.permute.xlu0 %1448
    %v1452 = vsel %vm739, %v1430, 0
    %v1455 = vsel %vm739, %v1431, 0
    %v1458 = vsel %vm739, %v1432, 0
    %1460 = vmatprep.subr.mxu0 0.0
    %v1461 = vand.u32 %v1425, 4294901760
    %1462 = vmatpush1.msra.mxu0 %v1461
    %1463 = vmatprep.subr.mxu0 0.0
    %v1464 = vand.u32 %v1426, 4294901760
    %1465 = vmatpush1.msra.mxu0 %v1464
    %1466 = vmatprep.subr.mxu0 0.0
    %v1467 = vand.u32 %v1427, 4294901760
    %1468 = vmatpush1.msra.mxu0 %v1467
    %1469 = vmatprep.subr.mxu0 0.0
    %v1470 = vand.u32 %v1428, 4294901760
    %1471 = vmatpush1.msra.mxu0 %v1470
    %1472 = vmatprep.subr.mxu0 0.0
    %v1473 = vand.u32 %v1429, 4294901760
    %1474 = vmatpush1.msra.mxu0 %v1473
    %1475 = vmatprep.subr.mxu0 0.0
    %1476 = vmatpush1.msra.mxu0 0.0
    %1477 = vmatprep.subr.mxu0 0.0
    %1478 = vmatpush1.msra.mxu0 0.0
    %1479 = vmatprep.subr.mxu0 0.0
    %1480 = vmatpush1.msra.mxu0 0.0
    %1481 = vmatprep.subr.mxu0 0.0
    %1482 = vmatpush1.msra.mxu0 0.0
    %1483 = vmatprep.subr.mxu0 0.0
    %1484 = vmatpush1.msra.mxu0 0.0
    %1485 = vmatprep.subr.mxu0 0.0
    %1486 = vmatpush1.msra.mxu0 0.0
    %1487 = vmatprep.subr.mxu0 0.0
    %1488 = vmatpush1.msra.mxu0 0.0
    %1489 = vmatprep.subr.mxu0 0.0
    %1490 = vmatpush1.msra.mxu0 0.0
    %1491 = vmatprep.subr.mxu0 0.0
    %1492 = vmatpush1.msra.mxu0 0.0
    %1493 = vmatprep.subr.mxu0 0.0
    %1494 = vmatpush1.msra.mxu0 0.0
    %1495 = vmatprep.subr.mxu0 0.0
    %1496 = vmatpush1.msra.mxu0 0.0
    %1497 = vmatprep.subr.mxu0 0.0
    %1498 = vmatpush1.msra.mxu0 0.0
    %1499 = vmatprep.subr.mxu0 0.0
    %1500 = vmatpush1.msra.mxu0 0.0
    %1501 = vmatprep.subr.mxu0 0.0
    %1502 = vmatpush1.msra.mxu0 0.0
    %1503 = vmatprep.subr.mxu0 0.0
    %1504 = vmatpush1.msra.mxu0 0.0
    %1505 = vmatprep.subr.mxu0 0.0
    %1506 = vmatpush1.msra.mxu0 0.0
    %1507 = vmatprep.subr.mxu0 0.0
    %1508 = vmatpush1.msra.mxu0 0.0
    %1509 = vmatprep.subr.mxu0 0.0
    %1510 = vmatpush1.msra.mxu0 0.0
    %1511 = vmatprep.subr.mxu0 0.0
    %1512 = vmatpush1.msra.mxu0 0.0
    %1513 = vmatprep.subr.mxu0 0.0
    %1514 = vmatpush1.msra.mxu0 0.0
    %1515 = vmatprep.subr.mxu0 0.0
    %1516 = vmatpush1.msra.mxu0 0.0
    %1517 = vmatprep.subr.mxu0 0.0
    %1518 = vmatpush1.msra.mxu0 0.0
    %1519 = vmatprep.subr.mxu0 0.0
    %1520 = vmatpush1.msra.mxu0 0.0
    %1521 = vmatprep.subr.mxu0 0.0
    %1522 = vmatpush1.msra.mxu0 0.0
    %1523 = vmatprep.subr.mxu0 0.0
    %1524 = vmatpush1.msra.mxu0 0.0
    %1525 = vmatprep.subr.mxu0 0.0
    %1526 = vmatpush1.msra.mxu0 0.0
    %1527 = vmatprep.subr.mxu0 0.0
    %1528 = vmatpush1.msra.mxu0 0.0
    %1529 = vmatprep.mubr.f32.mxu0 0.0
    %v1530 = vand.u32 %v1452, 4294901760
    %v1531 = vsub.f32 %v1452, %v1530
    %v1532 = vand.u32 %v1531, 4294901760
    %v1533 = vsub.f32 %v1531, %v1532
    %v1534 = vand.u32 %v1533, 4294901760
    %1535 = vmatmul.mubr.f32.gmra.mrb[0].mxu0 %v1534
    %v1536 = vpop.f32.mrb[0].mxu0
    %v1537 = vadd.f32 %v1439, %v1536
    %v1538 = vpop.f32.mrb[0].mxu0
    %1539 = vmatprep.mubr.f32.mxu0 0.0
    %v1540 = vand.u32 %v1455, 4294901760
    %v1541 = vsub.f32 %v1455, %v1540
    %v1542 = vand.u32 %v1541, 4294901760
    %v1543 = vsub.f32 %v1541, %v1542
    %v1544 = vand.u32 %v1543, 4294901760
    %1545 = vmatmul.mubr.f32.gmra.mrb[0].mxu0 %v1544
    %v1546 = vpop.f32.mrb[0].mxu0
    %v1547 = vadd.f32 %v1444, %v1546
    %v1548 = vpop.f32.mrb[0].mxu0
    %1549 = vmatprep.mubr.f32.mxu0 0.0
    %v1550 = vand.u32 %v1458, 4294901760
    %v1551 = vsub.f32 %v1458, %v1550
    %v1552 = vand.u32 %v1551, 4294901760
    %v1553 = vsub.f32 %v1551, %v1552
    %v1554 = vand.u32 %v1553, 4294901760
    %1555 = vmatmul.mubr.f32.gmra.mrb[0].mxu0 %v1554
    %v1556 = vpop.f32.mrb[0].mxu0
    %v1557 = vadd.f32 %v1449, %v1556
    %v1558 = vpop.f32.mrb[0].mxu0
    %1559 = vdwg.mxu0
    %1560 = vmatprep.subr.mxu0 0.0
    %v1561 = vand.u32 %v1425, 4294901760
    %v1562 = vsub.f32 %v1425, %v1561
    %v1563 = vand.u32 %v1562, 4294901760
    %v1564 = vsub.f32 %v1562, %v1563
    %v1565 = vand.u32 %v1564, 4294901760
    %1566 = vmatpush1.msra.mxu0 %v1565
    %1567 = vmatprep.subr.mxu0 0.0
    %v1568 = vand.u32 %v1426, 4294901760
    %v1569 = vsub.f32 %v1426, %v1568
    %v1570 = vand.u32 %v1569, 4294901760
    %v1571 = vsub.f32 %v1569, %v1570
    %v1572 = vand.u32 %v1571, 4294901760
    %1573 = vmatpush1.msra.mxu0 %v1572
    %1574 = vmatprep.subr.mxu0 0.0
    %v1575 = vand.u32 %v1427, 4294901760
    %v1576 = vsub.f32 %v1427, %v1575
    %v1577 = vand.u32 %v1576, 4294901760
    %v1578 = vsub.f32 %v1576, %v1577
    %v1579 = vand.u32 %v1578, 4294901760
    %1580 = vmatpush1.msra.mxu0 %v1579
    %1581 = vmatprep.subr.mxu0 0.0
    %v1582 = vand.u32 %v1428, 4294901760
    %v1583 = vsub.f32 %v1428, %v1582
    %v1584 = vand.u32 %v1583, 4294901760
    %v1585 = vsub.f32 %v1583, %v1584
    %v1586 = vand.u32 %v1585, 4294901760
    %1587 = vmatpush1.msra.mxu0 %v1586
    %1588 = vmatprep.subr.mxu0 0.0
    %v1589 = vand.u32 %v1429, 4294901760
    %v1590 = vsub.f32 %v1429, %v1589
    %v1591 = vand.u32 %v1590, 4294901760
    %v1592 = vsub.f32 %v1590, %v1591
    %v1593 = vand.u32 %v1592, 4294901760
    %1594 = vmatpush1.msra.mxu0 %v1593
    %1595 = vmatprep.subr.mxu0 0.0
    %1596 = vmatpush1.msra.mxu0 0.0
    %1597 = vmatprep.subr.mxu0 0.0
    %1598 = vmatpush1.msra.mxu0 0.0
    %1599 = vmatprep.subr.mxu0 0.0
    %1600 = vmatpush1.msra.mxu0 0.0
    %1601 = vmatprep.subr.mxu0 0.0
    %1602 = vmatpush1.msra.mxu0 0.0
    %1603 = vmatprep.subr.mxu0 0.0
    %1604 = vmatpush1.msra.mxu0 0.0
    %1605 = vmatprep.subr.mxu0 0.0
    %1606 = vmatpush1.msra.mxu0 0.0
    %1607 = vmatprep.subr.mxu0 0.0
    %1608 = vmatpush1.msra.mxu0 0.0
    %1609 = vmatprep.subr.mxu0 0.0
    %1610 = vmatpush1.msra.mxu0 0.0
    %1611 = vmatprep.subr.mxu0 0.0
    %1612 = vmatpush1.msra.mxu0 0.0
    %1613 = vmatprep.subr.mxu0 0.0
    %1614 = vmatpush1.msra.mxu0 0.0
    %1615 = vmatprep.subr.mxu0 0.0
    %1616 = vmatpush1.msra.mxu0 0.0
    %1617 = vmatprep.subr.mxu0 0.0
    %1618 = vmatpush1.msra.mxu0 0.0
    %1619 = vmatprep.subr.mxu0 0.0
    %1620 = vmatpush1.msra.mxu0 0.0
    %1621 = vmatprep.subr.mxu0 0.0
    %1622 = vmatpush1.msra.mxu0 0.0
    %1623 = vmatprep.subr.mxu0 0.0
    %1624 = vmatpush1.msra.mxu0 0.0
    %1625 = vmatprep.subr.mxu0 0.0
    %1626 = vmatpush1.msra.mxu0 0.0
    %1627 = vmatprep.subr.mxu0 0.0
    %1628 = vmatpush1.msra.mxu0 0.0
    %1629 = vmatprep.subr.mxu0 0.0
    %1630 = vmatpush1.msra.mxu0 0.0
    %1631 = vmatprep.subr.mxu0 0.0
    %1632 = vmatpush1.msra.mxu0 0.0
    %1633 = vmatprep.subr.mxu0 0.0
    %1634 = vmatpush1.msra.mxu0 0.0
    %1635 = vmatprep.subr.mxu0 0.0
    %1636 = vmatpush1.msra.mxu0 0.0
    %1637 = vmatprep.subr.mxu0 0.0
    %1638 = vmatpush1.msra.mxu0 0.0
    %1639 = vmatprep.subr.mxu0 0.0
    %1640 = vmatpush1.msra.mxu0 0.0
    %1641 = vmatprep.subr.mxu0 0.0
    %1642 = vmatpush1.msra.mxu0 0.0
    %1643 = vmatprep.subr.mxu0 0.0
    %1644 = vmatpush1.msra.mxu0 0.0
    %1645 = vmatprep.subr.mxu0 0.0
    %1646 = vmatpush1.msra.mxu0 0.0
    %1647 = vmatprep.subr.mxu0 0.0
    %1648 = vmatpush1.msra.mxu0 0.0
    %1649 = vmatprep.mubr.f32.mxu0 0.0
    %v1650 = vand.u32 %v1452, 4294901760
    %1651 = vmatmul.mubr.f32.gmra.mrb[0].mxu0 %v1650
    %v1652 = vpop.f32.mrb[0].mxu0
    %v1653 = vadd.f32 %v1537, %v1652
    %v1654 = vpop.f32.mrb[0].mxu0
    %1655 = vmatprep.mubr.f32.mxu0 0.0
    %v1656 = vand.u32 %v1455, 4294901760
    %1657 = vmatmul.mubr.f32.gmra.mrb[0].mxu0 %v1656
    %v1658 = vpop.f32.mrb[0].mxu0
    %v1659 = vadd.f32 %v1547, %v1658
    %v1660 = vpop.f32.mrb[0].mxu0
    %1661 = vmatprep.mubr.f32.mxu0 0.0
    %v1662 = vand.u32 %v1458, 4294901760
    %1663 = vmatmul.mubr.f32.gmra.mrb[0].mxu0 %v1662
    %v1664 = vpop.f32.mrb[0].mxu0
    %v1665 = vadd.f32 %v1557, %v1664
    %v1666 = vpop.f32.mrb[0].mxu0
    %1667 = vdwg.mxu0
    %1668 = vmatprep.subr.mxu0 0.0
    %v1669 = vand.u32 %v1425, 4294901760
    %v1670 = vsub.f32 %v1425, %v1669
    %1671 = vmatpush1.msra.mxu0 %v1670
    %1672 = vmatprep.subr.mxu0 0.0
    %v1673 = vand.u32 %v1426, 4294901760
    %v1674 = vsub.f32 %v1426, %v1673
    %1675 = vmatpush1.msra.mxu0 %v1674
    %1676 = vmatprep.subr.mxu0 0.0
    %v1677 = vand.u32 %v1427, 4294901760
    %v1678 = vsub.f32 %v1427, %v1677
    %1679 = vmatpush1.msra.mxu0 %v1678
    %1680 = vmatprep.subr.mxu0 0.0
    %v1681 = vand.u32 %v1428, 4294901760
    %v1682 = vsub.f32 %v1428, %v1681
    %1683 = vmatpush1.msra.mxu0 %v1682
    %1684 = vmatprep.subr.mxu0 0.0
    %v1685 = vand.u32 %v1429, 4294901760
    %v1686 = vsub.f32 %v1429, %v1685
    %1687 = vmatpush1.msra.mxu0 %v1686
    %1688 = vmatprep.subr.mxu0 0.0
    %1689 = vmatpush1.msra.mxu0 0.0
    %1690 = vmatprep.subr.mxu0 0.0
    %1691 = vmatpush1.msra.mxu0 0.0
    %1692 = vmatprep.subr.mxu0 0.0
    %1693 = vmatpush1.msra.mxu0 0.0
    %1694 = vmatprep.subr.mxu0 0.0
    %1695 = vmatpush1.msra.mxu0 0.0
    %1696 = vmatprep.subr.mxu0 0.0
    %1697 = vmatpush1.msra.mxu0 0.0
    %1698 = vmatprep.subr.mxu0 0.0
    %1699 = vmatpush1.msra.mxu0 0.0
    %1700 = vmatprep.subr.mxu0 0.0
    %1701 = vmatpush1.msra.mxu0 0.0
    %1702 = vmatprep.subr.mxu0 0.0
    %1703 = vmatpush1.msra.mxu0 0.0
    %1704 = vmatprep.subr.mxu0 0.0
    %1705 = vmatpush1.msra.mxu0 0.0
    %1706 = vmatprep.subr.mxu0 0.0
    %1707 = vmatpush1.msra.mxu0 0.0
    %1708 = vmatprep.subr.mxu0 0.0
    %1709 = vmatpush1.msra.mxu0 0.0
    %1710 = vmatprep.subr.mxu0 0.0
    %1711 = vmatpush1.msra.mxu0 0.0
    %1712 = vmatprep.subr.mxu0 0.0
    %1713 = vmatpush1.msra.mxu0 0.0
    %1714 = vmatprep.subr.mxu0 0.0
    %1715 = vmatpush1.msra.mxu0 0.0
    %1716 = vmatprep.subr.mxu0 0.0
    %1717 = vmatpush1.msra.mxu0 0.0
    %1718 = vmatprep.subr.mxu0 0.0
    %1719 = vmatpush1.msra.mxu0 0.0
    %1720 = vmatprep.subr.mxu0 0.0
    %1721 = vmatpush1.msra.mxu0 0.0
    %1722 = vmatprep.subr.mxu0 0.0
    %1723 = vmatpush1.msra.mxu0 0.0
    %1724 = vmatprep.subr.mxu0 0.0
    %1725 = vmatpush1.msra.mxu0 0.0
    %1726 = vmatprep.subr.mxu0 0.0
    %1727 = vmatpush1.msra.mxu0 0.0
    %1728 = vmatprep.subr.mxu0 0.0
    %1729 = vmatpush1.msra.mxu0 0.0
    %1730 = vmatprep.subr.mxu0 0.0
    %1731 = vmatpush1.msra.mxu0 0.0
    %1732 = vmatprep.subr.mxu0 0.0
    %1733 = vmatpush1.msra.mxu0 0.0
    %1734 = vmatprep.subr.mxu0 0.0
    %1735 = vmatpush1.msra.mxu0 0.0
    %1736 = vmatprep.subr.mxu0 0.0
    %1737 = vmatpush1.msra.mxu0 0.0
    %1738 = vmatprep.subr.mxu0 0.0
    %1739 = vmatpush1.msra.mxu0 0.0
    %1740 = vmatprep.subr.mxu0 0.0
    %1741 = vmatpush1.msra.mxu0 0.0
    %1742 = vmatprep.mubr.f32.mxu0 0.0
    %v1743 = vand.u32 %v1452, 4294901760
    %v1744 = vsub.f32 %v1452, %v1743
    %1745 = vmatmul.mubr.f32.gmra.mrb[0].mxu0 %v1744
    %v1746 = vpop.f32.mrb[0].mxu0
    %v1747 = vadd.f32 %v1653, %v1746
    %v1748 = vpop.f32.mrb[0].mxu0
    %1749 = vmatprep.mubr.f32.mxu0 0.0
    %v1750 = vand.u32 %v1455, 4294901760
    %v1751 = vsub.f32 %v1455, %v1750
    %1752 = vmatmul.mubr.f32.gmra.mrb[0].mxu0 %v1751
    %v1753 = vpop.f32.mrb[0].mxu0
    %v1754 = vadd.f32 %v1659, %v1753
    %v1755 = vpop.f32.mrb[0].mxu0
    %1756 = vmatprep.mubr.f32.mxu0 0.0
    %v1757 = vand.u32 %v1458, 4294901760
    %v1758 = vsub.f32 %v1458, %v1757
    %1759 = vmatmul.mubr.f32.gmra.mrb[0].mxu0 %v1758
    %v1760 = vpop.f32.mrb[0].mxu0
    %v1761 = vadd.f32 %v1665, %v1760
    %v1762 = vpop.f32.mrb[0].mxu0
    %1763 = vdwg.mxu0
    %1764 = vmatprep.subr.mxu0 0.0
    %v1765 = vand.u32 %v1425, 4294901760
    %1766 = vmatpush1.msra.mxu0 %v1765
    %1767 = vmatprep.subr.mxu0 0.0
    %v1768 = vand.u32 %v1426, 4294901760
    %1769 = vmatpush1.msra.mxu0 %v1768
    %1770 = vmatprep.subr.mxu0 0.0
    %v1771 = vand.u32 %v1427, 4294901760
    %1772 = vmatpush1.msra.mxu0 %v1771
    %1773 = vmatprep.subr.mxu0 0.0
    %v1774 = vand.u32 %v1428, 4294901760
    %1775 = vmatpush1.msra.mxu0 %v1774
    %1776 = vmatprep.subr.mxu0 0.0
    %v1777 = vand.u32 %v1429, 4294901760
    %1778 = vmatpush1.msra.mxu0 %v1777
    %1779 = vmatprep.subr.mxu0 0.0
    %1780 = vmatpush1.msra.mxu0 0.0
    %1781 = vmatprep.subr.mxu0 0.0
    %1782 = vmatpush1.msra.mxu0 0.0
    %1783 = vmatprep.subr.mxu0 0.0
    %1784 = vmatpush1.msra.mxu0 0.0
    %1785 = vmatprep.subr.mxu0 0.0
    %1786 = vmatpush1.msra.mxu0 0.0
    %1787 = vmatprep.subr.mxu0 0.0
    %1788 = vmatpush1.msra.mxu0 0.0
    %1789 = vmatprep.subr.mxu0 0.0
    %1790 = vmatpush1.msra.mxu0 0.0
    %1791 = vmatprep.subr.mxu0 0.0
    %1792 = vmatpush1.msra.mxu0 0.0
    %1793 = vmatprep.subr.mxu0 0.0
    %1794 = vmatpush1.msra.mxu0 0.0
    %1795 = vmatprep.subr.mxu0 0.0
    %1796 = vmatpush1.msra.mxu0 0.0
    %1797 = vmatprep.subr.mxu0 0.0
    %1798 = vmatpush1.msra.mxu0 0.0
    %1799 = vmatprep.subr.mxu0 0.0
    %1800 = vmatpush1.msra.mxu0 0.0
    %1801 = vmatprep.subr.mxu0 0.0
    %1802 = vmatpush1.msra.mxu0 0.0
    %1803 = vmatprep.subr.mxu0 0.0
    %1804 = vmatpush1.msra.mxu0 0.0
    %1805 = vmatprep.subr.mxu0 0.0
    %1806 = vmatpush1.msra.mxu0 0.0
    %1807 = vmatprep.subr.mxu0 0.0
    %1808 = vmatpush1.msra.mxu0 0.0
    %1809 = vmatprep.subr.mxu0 0.0
    %1810 = vmatpush1.msra.mxu0 0.0
    %1811 = vmatprep.subr.mxu0 0.0
    %1812 = vmatpush1.msra.mxu0 0.0
    %1813 = vmatprep.subr.mxu0 0.0
    %1814 = vmatpush1.msra.mxu0 0.0
    %1815 = vmatprep.subr.mxu0 0.0
    %1816 = vmatpush1.msra.mxu0 0.0
    %1817 = vmatprep.subr.mxu0 0.0
    %1818 = vmatpush1.msra.mxu0 0.0
    %1819 = vmatprep.subr.mxu0 0.0
    %1820 = vmatpush1.msra.mxu0 0.0
    %1821 = vmatprep.subr.mxu0 0.0
    %1822 = vmatpush1.msra.mxu0 0.0
    %1823 = vmatprep.subr.mxu0 0.0
    %1824 = vmatpush1.msra.mxu0 0.0
    %1825 = vmatprep.subr.mxu0 0.0
    %1826 = vmatpush1.msra.mxu0 0.0
    %1827 = vmatprep.subr.mxu0 0.0
    %1828 = vmatpush1.msra.mxu0 0.0
    %1829 = vmatprep.subr.mxu0 0.0
    %1830 = vmatpush1.msra.mxu0 0.0
    %1831 = vmatprep.subr.mxu0 0.0
    %1832 = vmatpush1.msra.mxu0 0.0
    %1833 = vmatprep.mubr.f32.mxu0 0.0
    %v1834 = vand.u32 %v1452, 4294901760
    %v1835 = vsub.f32 %v1452, %v1834
    %v1836 = vand.u32 %v1835, 4294901760
    %1837 = vmatmul.mubr.f32.gmra.mrb[0].mxu0 %v1836
    %v1838 = vpop.f32.mrb[0].mxu0
    %v1839 = vadd.f32 %v1747, %v1838
    %v1840 = vpop.f32.mrb[0].mxu0
    %1841 = vmatprep.mubr.f32.mxu0 0.0
    %v1842 = vand.u32 %v1455, 4294901760
    %v1843 = vsub.f32 %v1455, %v1842
    %v1844 = vand.u32 %v1843, 4294901760
    %1845 = vmatmul.mubr.f32.gmra.mrb[0].mxu0 %v1844
    %v1846 = vpop.f32.mrb[0].mxu0
    %v1847 = vadd.f32 %v1754, %v1846
    %v1848 = vpop.f32.mrb[0].mxu0
    %1849 = vmatprep.mubr.f32.mxu0 0.0
    %v1850 = vand.u32 %v1458, 4294901760
    %v1851 = vsub.f32 %v1458, %v1850
    %v1852 = vand.u32 %v1851, 4294901760
    %1853 = vmatmul.mubr.f32.gmra.mrb[0].mxu0 %v1852
    %v1854 = vpop.f32.mrb[0].mxu0
    %v1855 = vadd.f32 %v1761, %v1854
    %v1856 = vpop.f32.mrb[0].mxu0
    %1857 = vdwg.mxu0
    %1858 = vmatprep.subr.mxu0 0.0
    %v1859 = vand.u32 %v1425, 4294901760
    %v1860 = vsub.f32 %v1425, %v1859
    %v1861 = vand.u32 %v1860, 4294901760
    %1862 = vmatpush1.msra.mxu0 %v1861
    %1863 = vmatprep.subr.mxu0 0.0
    %v1864 = vand.u32 %v1426, 4294901760
    %v1865 = vsub.f32 %v1426, %v1864
    %v1866 = vand.u32 %v1865, 4294901760
    %1867 = vmatpush1.msra.mxu0 %v1866
    %1868 = vmatprep.subr.mxu0 0.0
    %v1869 = vand.u32 %v1427, 4294901760
    %v1870 = vsub.f32 %v1427, %v1869
    %v1871 = vand.u32 %v1870, 4294901760
    %1872 = vmatpush1.msra.mxu0 %v1871
    %1873 = vmatprep.subr.mxu0 0.0
    %v1874 = vand.u32 %v1428, 4294901760
    %v1875 = vsub.f32 %v1428, %v1874
    %v1876 = vand.u32 %v1875, 4294901760
    %1877 = vmatpush1.msra.mxu0 %v1876
    %1878 = vmatprep.subr.mxu0 0.0
    %v1879 = vand.u32 %v1429, 4294901760
    %v1880 = vsub.f32 %v1429, %v1879
    %v1881 = vand.u32 %v1880, 4294901760
    %1882 = vmatpush1.msra.mxu0 %v1881
    %1883 = vmatprep.subr.mxu0 0.0
    %1884 = vmatpush1.msra.mxu0 0.0
    %1885 = vmatprep.subr.mxu0 0.0
    %1886 = vmatpush1.msra.mxu0 0.0
    %1887 = vmatprep.subr.mxu0 0.0
    %1888 = vmatpush1.msra.mxu0 0.0
    %1889 = vmatprep.subr.mxu0 0.0
    %1890 = vmatpush1.msra.mxu0 0.0
    %1891 = vmatprep.subr.mxu0 0.0
    %1892 = vmatpush1.msra.mxu0 0.0
    %1893 = vmatprep.subr.mxu0 0.0
    %1894 = vmatpush1.msra.mxu0 0.0
    %1895 = vmatprep.subr.mxu0 0.0
    %1896 = vmatpush1.msra.mxu0 0.0
    %1897 = vmatprep.subr.mxu0 0.0
    %1898 = vmatpush1.msra.mxu0 0.0
    %1899 = vmatprep.subr.mxu0 0.0
    %1900 = vmatpush1.msra.mxu0 0.0
    %1901 = vmatprep.subr.mxu0 0.0
    %1902 = vmatpush1.msra.mxu0 0.0
    %1903 = vmatprep.subr.mxu0 0.0
    %1904 = vmatpush1.msra.mxu0 0.0
    %1905 = vmatprep.subr.mxu0 0.0
    %1906 = vmatpush1.msra.mxu0 0.0
    %1907 = vmatprep.subr.mxu0 0.0
    %1908 = vmatpush1.msra.mxu0 0.0
    %1909 = vmatprep.subr.mxu0 0.0
    %1910 = vmatpush1.msra.mxu0 0.0
    %1911 = vmatprep.subr.mxu0 0.0
    %1912 = vmatpush1.msra.mxu0 0.0
    %1913 = vmatprep.subr.mxu0 0.0
    %1914 = vmatpush1.msra.mxu0 0.0
    %1915 = vmatprep.subr.mxu0 0.0
    %1916 = vmatpush1.msra.mxu0 0.0
    %1917 = vmatprep.subr.mxu0 0.0
    %1918 = vmatpush1.msra.mxu0 0.0
    %1919 = vmatprep.subr.mxu0 0.0
    %1920 = vmatpush1.msra.mxu0 0.0
    %1921 = vmatprep.subr.mxu0 0.0
    %1922 = vmatpush1.msra.mxu0 0.0
    %1923 = vmatprep.subr.mxu0 0.0
    %1924 = vmatpush1.msra.mxu0 0.0
    %1925 = vmatprep.subr.mxu0 0.0
    %1926 = vmatpush1.msra.mxu0 0.0
    %1927 = vmatprep.subr.mxu0 0.0
    %1928 = vmatpush1.msra.mxu0 0.0
    %1929 = vmatprep.subr.mxu0 0.0
    %1930 = vmatpush1.msra.mxu0 0.0
    %1931 = vmatprep.subr.mxu0 0.0
    %1932 = vmatpush1.msra.mxu0 0.0
    %1933 = vmatprep.subr.mxu0 0.0
    %1934 = vmatpush1.msra.mxu0 0.0
    %1935 = vmatprep.subr.mxu0 0.0
    %1936 = vmatpush1.msra.mxu0 0.0
    %1937 = vmatprep.mubr.f32.mxu0 0.0
    %v1938 = vand.u32 %v1452, 4294901760
    %1939 = vmatmul.mubr.f32.gmra.mrb[0].mxu0 %v1938
    %v1940 = vpop.f32.mrb[0].mxu0
    %v1941 = vadd.f32 %v1839, %v1940
    %v1942 = vpop.f32.mrb[0].mxu0
    %1943 = vmatprep.mubr.f32.mxu0 0.0
    %v1944 = vand.u32 %v1455, 4294901760
    %1945 = vmatmul.mubr.f32.gmra.mrb[0].mxu0 %v1944
    %v1946 = vpop.f32.mrb[0].mxu0
    %v1947 = vadd.f32 %v1847, %v1946
    %v1948 = vpop.f32.mrb[0].mxu0
    %1949 = vmatprep.mubr.f32.mxu0 0.0
    %v1950 = vand.u32 %v1458, 4294901760
    %1951 = vmatmul.mubr.f32.gmra.mrb[0].mxu0 %v1950
    %v1952 = vpop.f32.mrb[0].mxu0
    %v1953 = vadd.f32 %v1855, %v1952
    %v1954 = vpop.f32.mrb[0].mxu0
    %1955 = vdwg.mxu0
    %1956 = vmatprep.subr.mxu0 0.0
    %v1957 = vand.u32 %v1425, 4294901760
    %1958 = vmatpush1.msra.mxu0 %v1957
    %1959 = vmatprep.subr.mxu0 0.0
    %v1960 = vand.u32 %v1426, 4294901760
    %1961 = vmatpush1.msra.mxu0 %v1960
    %1962 = vmatprep.subr.mxu0 0.0
    %v1963 = vand.u32 %v1427, 4294901760
    %1964 = vmatpush1.msra.mxu0 %v1963
    %1965 = vmatprep.subr.mxu0 0.0
    %v1966 = vand.u32 %v1428, 4294901760
    %1967 = vmatpush1.msra.mxu0 %v1966
    %1968 = vmatprep.subr.mxu0 0.0
    %v1969 = vand.u32 %v1429, 4294901760
    %1970 = vmatpush1.msra.mxu0 %v1969
    %1971 = vmatprep.subr.mxu0 0.0
    %1972 = vmatpush1.msra.mxu0 0.0
    %1973 = vmatprep.subr.mxu0 0.0
    %1974 = vmatpush1.msra.mxu0 0.0
    %1975 = vmatprep.subr.mxu0 0.0
    %1976 = vmatpush1.msra.mxu0 0.0
    %1977 = vmatprep.subr.mxu0 0.0
    %1978 = vmatpush1.msra.mxu0 0.0
    %1979 = vmatprep.subr.mxu0 0.0
    %1980 = vmatpush1.msra.mxu0 0.0
    %1981 = vmatprep.subr.mxu0 0.0
    %1982 = vmatpush1.msra.mxu0 0.0
    %1983 = vmatprep.subr.mxu0 0.0
    %1984 = vmatpush1.msra.mxu0 0.0
    %1985 = vmatprep.subr.mxu0 0.0
    %1986 = vmatpush1.msra.mxu0 0.0
    %1987 = vmatprep.subr.mxu0 0.0
    %1988 = vmatpush1.msra.mxu0 0.0
    %1989 = vmatprep.subr.mxu0 0.0
    %1990 = vmatpush1.msra.mxu0 0.0
    %1991 = vmatprep.subr.mxu0 0.0
    %1992 = vmatpush1.msra.mxu0 0.0
    %1993 = vmatprep.subr.mxu0 0.0
    %1994 = vmatpush1.msra.mxu0 0.0
    %1995 = vmatprep.subr.mxu0 0.0
    %1996 = vmatpush1.msra.mxu0 0.0
    %1997 = vmatprep.subr.mxu0 0.0
    %1998 = vmatpush1.msra.mxu0 0.0
    %1999 = vmatprep.subr.mxu0 0.0
    %2000 = vmatpush1.msra.mxu0 0.0
    %2001 = vmatprep.subr.mxu0 0.0
    %2002 = vmatpush1.msra.mxu0 0.0
    %2003 = vmatprep.subr.mxu0 0.0
    %2004 = vmatpush1.msra.mxu0 0.0
    %2005 = vmatprep.subr.mxu0 0.0
    %2006 = vmatpush1.msra.mxu0 0.0
    %2007 = vmatprep.subr.mxu0 0.0
    %2008 = vmatpush1.msra.mxu0 0.0
    %2009 = vmatprep.subr.mxu0 0.0
    %2010 = vmatpush1.msra.mxu0 0.0
    %2011 = vmatprep.subr.mxu0 0.0
    %2012 = vmatpush1.msra.mxu0 0.0
    %2013 = vmatprep.subr.mxu0 0.0
    %2014 = vmatpush1.msra.mxu0 0.0
    %2015 = vmatprep.subr.mxu0 0.0
    %2016 = vmatpush1.msra.mxu0 0.0
    %2017 = vmatprep.subr.mxu0 0.0
    %2018 = vmatpush1.msra.mxu0 0.0
    %2019 = vmatprep.subr.mxu0 0.0
    %2020 = vmatpush1.msra.mxu0 0.0
    %2021 = vmatprep.subr.mxu0 0.0
    %2022 = vmatpush1.msra.mxu0 0.0
    %2023 = vmatprep.subr.mxu0 0.0
    %2024 = vmatpush1.msra.mxu0 0.0
    %2025 = vmatprep.mubr.f32.mxu0 0.0
    %v2026 = vand.u32 %v1452, 4294901760
    %2027 = vmatmul.mubr.f32.gmra.mrb[0].mxu0 %v2026
    %v2028 = vpop.f32.mrb[0].mxu0
    %v2029 = vadd.f32 %v1941, %v2028
    %v2030 = vpop.f32.mrb[0].mxu0
    %2031 = vmatprep.mubr.f32.mxu0 0.0
    %v2032 = vand.u32 %v1455, 4294901760
    %2033 = vmatmul.mubr.f32.gmra.mrb[0].mxu0 %v2032
    %v2034 = vpop.f32.mrb[0].mxu0
    %v2035 = vadd.f32 %v1947, %v2034
    %v2036 = vpop.f32.mrb[0].mxu0
    %2037 = vmatprep.mubr.f32.mxu0 0.0
    %v2038 = vand.u32 %v1458, 4294901760
    %2039 = vmatmul.mubr.f32.gmra.mrb[0].mxu0 %v2038
    %v2040 = vpop.f32.mrb[0].mxu0
    %v2041 = vadd.f32 %v1953, %v2040
    %v2042 = vpop.f32.mrb[0].mxu0
    %2043 = vdwg.mxu0
    %v2044 = vtanh.pop %v2029
    %v2045 = vtanh.pop %v2035
    %v2046 = vtanh.pop %v2041
    %v2047 = vld [vmem:[#allocation2 + $0xd0] sm:$0xff]
    %v2048 = vld [vmem:[#allocation2 + $0xd8] sm:$0xff]
    %v2049 = vld [vmem:[#allocation2 + $0xe0] sm:$0xf]
    %v2050 = vld [vmem:[#allocation2 + $0xe8] sm:$0xff]
    %v2051 = vld [vmem:[#allocation2 + $0xf0] sm:$0xff]
    %v2052 = vld [vmem:[#allocation2 + $0xf8] sm:$0xf]
    %2054 = vset.pattern.permute.xlu0 0
    %2055 = vperm.xlu0 %2054, %v2050
    %v2056 = vpop.permute.xlu0 %2055
    %2059 = vset.pattern.permute.xlu0 0
    %2060 = vperm.xlu0 %2059, %v2051
    %v2061 = vpop.permute.xlu0 %2060
    %2064 = vset.pattern.permute.xlu0 0
    %2065 = vperm.xlu0 %2064, %v2052
    %v2066 = vpop.permute.xlu0 %2065
    %vm2068 = vcmask 162816
    %v2070 = vsel %vm2068, %v2047, 0
    %v2073 = vsel %vm2068, %v2048, 0
    %v2076 = vsel %vm2068, %v2049, 0
    %vm2078 = vcmask 1043456
    %v2080 = vsel %vm2078, %v2046, 0
    %2082 = vmatprep.subr.mxu0 0.0
    %v2083 = vand.u32 %v2044, 4294901760
    %2084 = vmatpush1.msra.mxu0 %v2083
    %2085 = vmatprep.subr.mxu0 0.0
    %v2086 = vand.u32 %v2045, 4294901760
    %2087 = vmatpush1.msra.mxu0 %v2086
    %2088 = vmatprep.subr.mxu0 0.0
    %v2089 = vand.u32 %v2080, 4294901760
    %2090 = vmatpush1.msra.mxu0 %v2089
    %2091 = vmatprep.subr.mxu0 0.0
    %2092 = vmatpush1.msra.mxu0 0.0
    %2093 = vmatprep.subr.mxu0 0.0
    %2094 = vmatpush1.msra.mxu0 0.0
    %2095 = vmatprep.subr.mxu0 0.0
    %2096 = vmatpush1.msra.mxu0 0.0
    %2097 = vmatprep.subr.mxu0 0.0
    %2098 = vmatpush1.msra.mxu0 0.0
    %2099 = vmatprep.subr.mxu0 0.0
    %2100 = vmatpush1.msra.mxu0 0.0
    %2101 = vmatprep.subr.mxu0 0.0
    %2102 = vmatpush1.msra.mxu0 0.0
    %2103 = vmatprep.subr.mxu0 0.0
    %2104 = vmatpush1.msra.mxu0 0.0
    %2105 = vmatprep.subr.mxu0 0.0
    %2106 = vmatpush1.msra.mxu0 0.0
    %2107 = vmatprep.subr.mxu0 0.0
    %2108 = vmatpush1.msra.mxu0 0.0
    %2109 = vmatprep.subr.mxu0 0.0
    %2110 = vmatpush1.msra.mxu0 0.0
    %2111 = vmatprep.subr.mxu0 0.0
    %2112 = vmatpush1.msra.mxu0 0.0
    %2113 = vmatprep.subr.mxu0 0.0
    %2114 = vmatpush1.msra.mxu0 0.0
    %2115 = vmatprep.subr.mxu0 0.0
    %2116 = vmatpush1.msra.mxu0 0.0
    %2117 = vmatprep.subr.mxu0 0.0
    %2118 = vmatpush1.msra.mxu0 0.0
    %2119 = vmatprep.subr.mxu0 0.0
    %2120 = vmatpush1.msra.mxu0 0.0
    %2121 = vmatprep.subr.mxu0 0.0
    %2122 = vmatpush1.msra.mxu0 0.0
    %2123 = vmatprep.subr.mxu0 0.0
    %2124 = vmatpush1.msra.mxu0 0.0
    %2125 = vmatprep.subr.mxu0 0.0
    %2126 = vmatpush1.msra.mxu0 0.0
    %2127 = vmatprep.subr.mxu0 0.0
    %2128 = vmatpush1.msra.mxu0 0.0
    %2129 = vmatprep.subr.mxu0 0.0
    %2130 = vmatpush1.msra.mxu0 0.0
    %2131 = vmatprep.subr.mxu0 0.0
    %2132 = vmatpush1.msra.mxu0 0.0
    %2133 = vmatprep.subr.mxu0 0.0
    %2134 = vmatpush1.msra.mxu0 0.0
    %2135 = vmatprep.subr.mxu0 0.0
    %2136 = vmatpush1.msra.mxu0 0.0
    %2137 = vmatprep.subr.mxu0 0.0
    %2138 = vmatpush1.msra.mxu0 0.0
    %2139 = vmatprep.subr.mxu0 0.0
    %2140 = vmatpush1.msra.mxu0 0.0
    %2141 = vmatprep.subr.mxu0 0.0
    %2142 = vmatpush1.msra.mxu0 0.0
    %2143 = vmatprep.subr.mxu0 0.0
    %2144 = vmatpush1.msra.mxu0 0.0
    %2145 = vmatprep.subr.mxu0 0.0
    %2146 = vmatpush1.msra.mxu0 0.0
    %2147 = vmatprep.subr.mxu0 0.0
    %2148 = vmatpush1.msra.mxu0 0.0
    %2149 = vmatprep.mubr.f32.mxu0 0.0
    %v2150 = vand.u32 %v2070, 4294901760
    %v2151 = vsub.f32 %v2070, %v2150
    %v2152 = vand.u32 %v2151, 4294901760
    %v2153 = vsub.f32 %v2151, %v2152
    %v2154 = vand.u32 %v2153, 4294901760
    %2155 = vmatmul.mubr.f32.gmra.mrb[0].mxu0 %v2154
    %v2156 = vpop.f32.mrb[0].mxu0
    %v2157 = vadd.f32 %v2056, %v2156
    %v2158 = vpop.f32.mrb[0].mxu0
    %2159 = vmatprep.mubr.f32.mxu0 0.0
    %v2160 = vand.u32 %v2073, 4294901760
    %v2161 = vsub.f32 %v2073, %v2160
    %v2162 = vand.u32 %v2161, 4294901760
    %v2163 = vsub.f32 %v2161, %v2162
    %v2164 = vand.u32 %v2163, 4294901760
    %2165 = vmatmul.mubr.f32.gmra.mrb[0].mxu0 %v2164
    %v2166 = vpop.f32.mrb[0].mxu0
    %v2167 = vadd.f32 %v2061, %v2166
    %v2168 = vpop.f32.mrb[0].mxu0
    %2169 = vmatprep.mubr.f32.mxu0 0.0
    %v2170 = vand.u32 %v2076, 4294901760
    %v2171 = vsub.f32 %v2076, %v2170
    %v2172 = vand.u32 %v2171, 4294901760
    %v2173 = vsub.f32 %v2171, %v2172
    %v2174 = vand.u32 %v2173, 4294901760
    %2175 = vmatmul.mubr.f32.gmra.mrb[0].mxu0 %v2174
    %v2176 = vpop.f32.mrb[0].mxu0
    %v2177 = vadd.f32 %v2066, %v2176
    %v2178 = vpop.f32.mrb[0].mxu0
    %2179 = vdwg.mxu0
    %2180 = vmatprep.subr.mxu0 0.0
    %v2181 = vand.u32 %v2044, 4294901760
    %v2182 = vsub.f32 %v2044, %v2181
    %v2183 = vand.u32 %v2182, 4294901760
    %v2184 = vsub.f32 %v2182, %v2183
    %v2185 = vand.u32 %v2184, 4294901760
    %2186 = vmatpush1.msra.mxu0 %v2185
    %2187 = vmatprep.subr.mxu0 0.0
    %v2188 = vand.u32 %v2045, 4294901760
    %v2189 = vsub.f32 %v2045, %v2188
    %v2190 = vand.u32 %v2189, 4294901760
    %v2191 = vsub.f32 %v2189, %v2190
    %v2192 = vand.u32 %v2191, 4294901760
    %2193 = vmatpush1.msra.mxu0 %v2192
    %2194 = vmatprep.subr.mxu0 0.0
    %v2195 = vand.u32 %v2080, 4294901760
    %v2196 = vsub.f32 %v2080, %v2195
    %v2197 = vand.u32 %v2196, 4294901760
    %v2198 = vsub.f32 %v2196, %v2197
    %v2199 = vand.u32 %v2198, 4294901760
    %2200 = vmatpush1.msra.mxu0 %v2199
    %2201 = vmatprep.subr.mxu0 0.0
    %2202 = vmatpush1.msra.mxu0 0.0
    %2203 = vmatprep.subr.mxu0 0.0
    %2204 = vmatpush1.msra.mxu0 0.0
    %2205 = vmatprep.subr.mxu0 0.0
    %2206 = vmatpush1.msra.mxu0 0.0
    %2207 = vmatprep.subr.mxu0 0.0
    %2208 = vmatpush1.msra.mxu0 0.0
    %2209 = vmatprep.subr.mxu0 0.0
    %2210 = vmatpush1.msra.mxu0 0.0
    %2211 = vmatprep.subr.mxu0 0.0
    %2212 = vmatpush1.msra.mxu0 0.0
    %2213 = vmatprep.subr.mxu0 0.0
    %2214 = vmatpush1.msra.mxu0 0.0
    %2215 = vmatprep.subr.mxu0 0.0
    %2216 = vmatpush1.msra.mxu0 0.0
    %2217 = vmatprep.subr.mxu0 0.0
    %2218 = vmatpush1.msra.mxu0 0.0
    %2219 = vmatprep.subr.mxu0 0.0
    %2220 = vmatpush1.msra.mxu0 0.0
    %2221 = vmatprep.subr.mxu0 0.0
    %2222 = vmatpush1.msra.mxu0 0.0
    %2223 = vmatprep.subr.mxu0 0.0
    %2224 = vmatpush1.msra.mxu0 0.0
    %2225 = vmatprep.subr.mxu0 0.0
    %2226 = vmatpush1.msra.mxu0 0.0
    %2227 = vmatprep.subr.mxu0 0.0
    %2228 = vmatpush1.msra.mxu0 0.0
    %2229 = vmatprep.subr.mxu0 0.0
    %2230 = vmatpush1.msra.mxu0 0.0
    %2231 = vmatprep.subr.mxu0 0.0
    %2232 = vmatpush1.msra.mxu0 0.0
    %2233 = vmatprep.subr.mxu0 0.0
    %2234 = vmatpush1.msra.mxu0 0.0
    %2235 = vmatprep.subr.mxu0 0.0
    %2236 = vmatpush1.msra.mxu0 0.0
    %2237 = vmatprep.subr.mxu0 0.0
    %2238 = vmatpush1.msra.mxu0 0.0
    %2239 = vmatprep.subr.mxu0 0.0
    %2240 = vmatpush1.msra.mxu0 0.0
    %2241 = vmatprep.subr.mxu0 0.0
    %2242 = vmatpush1.msra.mxu0 0.0
    %2243 = vmatprep.subr.mxu0 0.0
    %2244 = vmatpush1.msra.mxu0 0.0
    %2245 = vmatprep.subr.mxu0 0.0
    %2246 = vmatpush1.msra.mxu0 0.0
    %2247 = vmatprep.subr.mxu0 0.0
    %2248 = vmatpush1.msra.mxu0 0.0
    %2249 = vmatprep.subr.mxu0 0.0
    %2250 = vmatpush1.msra.mxu0 0.0
    %2251 = vmatprep.subr.mxu0 0.0
    %2252 = vmatpush1.msra.mxu0 0.0
    %2253 = vmatprep.subr.mxu0 0.0
    %2254 = vmatpush1.msra.mxu0 0.0
    %2255 = vmatprep.subr.mxu0 0.0
    %2256 = vmatpush1.msra.mxu0 0.0
    %2257 = vmatprep.subr.mxu0 0.0
    %2258 = vmatpush1.msra.mxu0 0.0
    %2259 = vmatprep.mubr.f32.mxu0 0.0
    %v2260 = vand.u32 %v2070, 4294901760
    %2261 = vmatmul.mubr.f32.gmra.mrb[0].mxu0 %v2260
    %v2262 = vpop.f32.mrb[0].mxu0
    %v2263 = vadd.f32 %v2157, %v2262
    %v2264 = vpop.f32.mrb[0].mxu0
    %2265 = vmatprep.mubr.f32.mxu0 0.0
    %v2266 = vand.u32 %v2073, 4294901760
    %2267 = vmatmul.mubr.f32.gmra.mrb[0].mxu0 %v2266
    %v2268 = vpop.f32.mrb[0].mxu0
    %v2269 = vadd.f32 %v2167, %v2268
    %v2270 = vpop.f32.mrb[0].mxu0
    %2271 = vmatprep.mubr.f32.mxu0 0.0
    %v2272 = vand.u32 %v2076, 4294901760
    %2273 = vmatmul.mubr.f32.gmra.mrb[0].mxu0 %v2272
    %v2274 = vpop.f32.mrb[0].mxu0
    %v2275 = vadd.f32 %v2177, %v2274
    %v2276 = vpop.f32.mrb[0].mxu0
    %2277 = vdwg.mxu0
    %2278 = vmatprep.subr.mxu0 0.0
    %v2279 = vand.u32 %v2044, 4294901760
    %v2280 = vsub.f32 %v2044, %v2279
    %2281 = vmatpush1.msra.mxu0 %v2280
    %2282 = vmatprep.subr.mxu0 0.0
    %v2283 = vand.u32 %v2045, 4294901760
    %v2284 = vsub.f32 %v2045, %v2283
    %2285 = vmatpush1.msra.mxu0 %v2284
    %2286 = vmatprep.subr.mxu0 0.0
    %v2287 = vand.u32 %v2080, 4294901760
    %v2288 = vsub.f32 %v2080, %v2287
    %2289 = vmatpush1.msra.mxu0 %v2288
    %2290 = vmatprep.subr.mxu0 0.0
    %2291 = vmatpush1.msra.mxu0 0.0
    %2292 = vmatprep.subr.mxu0 0.0
    %2293 = vmatpush1.msra.mxu0 0.0
    %2294 = vmatprep.subr.mxu0 0.0
    %2295 = vmatpush1.msra.mxu0 0.0
    %2296 = vmatprep.subr.mxu0 0.0
    %2297 = vmatpush1.msra.mxu0 0.0
    %2298 = vmatprep.subr.mxu0 0.0
    %2299 = vmatpush1.msra.mxu0 0.0
    %2300 = vmatprep.subr.mxu0 0.0
    %2301 = vmatpush1.msra.mxu0 0.0
    %2302 = vmatprep.subr.mxu0 0.0
    %2303 = vmatpush1.msra.mxu0 0.0
    %2304 = vmatprep.subr.mxu0 0.0
    %2305 = vmatpush1.msra.mxu0 0.0
    %2306 = vmatprep.subr.mxu0 0.0
    %2307 = vmatpush1.msra.mxu0 0.0
    %2308 = vmatprep.subr.mxu0 0.0
    %2309 = vmatpush1.msra.mxu0 0.0
    %2310 = vmatprep.subr.mxu0 0.0
    %2311 = vmatpush1.msra.mxu0 0.0
    %2312 = vmatprep.subr.mxu0 0.0
    %2313 = vmatpush1.msra.mxu0 0.0
    %2314 = vmatprep.subr.mxu0 0.0
    %2315 = vmatpush1.msra.mxu0 0.0
    %2316 = vmatprep.subr.mxu0 0.0
    %2317 = vmatpush1.msra.mxu0 0.0
    %2318 = vmatprep.subr.mxu0 0.0
    %2319 = vmatpush1.msra.mxu0 0.0
    %2320 = vmatprep.subr.mxu0 0.0
    %2321 = vmatpush1.msra.mxu0 0.0
    %2322 = vmatprep.subr.mxu0 0.0
    %2323 = vmatpush1.msra.mxu0 0.0
    %2324 = vmatprep.subr.mxu0 0.0
    %2325 = vmatpush1.msra.mxu0 0.0
    %2326 = vmatprep.subr.mxu0 0.0
    %2327 = vmatpush1.msra.mxu0 0.0
    %2328 = vmatprep.subr.mxu0 0.0
    %2329 = vmatpush1.msra.mxu0 0.0
    %2330 = vmatprep.subr.mxu0 0.0
    %2331 = vmatpush1.msra.mxu0 0.0
    %2332 = vmatprep.subr.mxu0 0.0
    %2333 = vmatpush1.msra.mxu0 0.0
    %2334 = vmatprep.subr.mxu0 0.0
    %2335 = vmatpush1.msra.mxu0 0.0
    %2336 = vmatprep.subr.mxu0 0.0
    %2337 = vmatpush1.msra.mxu0 0.0
    %2338 = vmatprep.subr.mxu0 0.0
    %2339 = vmatpush1.msra.mxu0 0.0
    %2340 = vmatprep.subr.mxu0 0.0
    %2341 = vmatpush1.msra.mxu0 0.0
    %2342 = vmatprep.subr.mxu0 0.0
    %2343 = vmatpush1.msra.mxu0 0.0
    %2344 = vmatprep.subr.mxu0 0.0
    %2345 = vmatpush1.msra.mxu0 0.0
    %2346 = vmatprep.subr.mxu0 0.0
    %2347 = vmatpush1.msra.mxu0 0.0
    %2348 = vmatprep.mubr.f32.mxu0 0.0
    %v2349 = vand.u32 %v2070, 4294901760
    %v2350 = vsub.f32 %v2070, %v2349
    %2351 = vmatmul.mubr.f32.gmra.mrb[0].mxu0 %v2350
    %v2352 = vpop.f32.mrb[0].mxu0
    %v2353 = vadd.f32 %v2263, %v2352
    %v2354 = vpop.f32.mrb[0].mxu0
    %2355 = vmatprep.mubr.f32.mxu0 0.0
    %v2356 = vand.u32 %v2073, 4294901760
    %v2357 = vsub.f32 %v2073, %v2356
    %2358 = vmatmul.mubr.f32.gmra.mrb[0].mxu0 %v2357
    %v2359 = vpop.f32.mrb[0].mxu0
    %v2360 = vadd.f32 %v2269, %v2359
    %v2361 = vpop.f32.mrb[0].mxu0
    %2362 = vmatprep.mubr.f32.mxu0 0.0
    %v2363 = vand.u32 %v2076, 4294901760
    %v2364 = vsub.f32 %v2076, %v2363
    %2365 = vmatmul.mubr.f32.gmra.mrb[0].mxu0 %v2364
    %v2366 = vpop.f32.mrb[0].mxu0
    %v2367 = vadd.f32 %v2275, %v2366
    %v2368 = vpop.f32.mrb[0].mxu0
    %2369 = vdwg.mxu0
    %2370 = vmatprep.subr.mxu0 0.0
    %v2371 = vand.u32 %v2044, 4294901760
    %2372 = vmatpush1.msra.mxu0 %v2371
    %2373 = vmatprep.subr.mxu0 0.0
    %v2374 = vand.u32 %v2045, 4294901760
    %2375 = vmatpush1.msra.mxu0 %v2374
    %2376 = vmatprep.subr.mxu0 0.0
    %v2377 = vand.u32 %v2080, 4294901760
    %2378 = vmatpush1.msra.mxu0 %v2377
    %2379 = vmatprep.subr.mxu0 0.0
    %2380 = vmatpush1.msra.mxu0 0.0
    %2381 = vmatprep.subr.mxu0 0.0
    %2382 = vmatpush1.msra.mxu0 0.0
    %2383 = vmatprep.subr.mxu0 0.0
    %2384 = vmatpush1.msra.mxu0 0.0
    %2385 = vmatprep.subr.mxu0 0.0
    %2386 = vmatpush1.msra.mxu0 0.0
    %2387 = vmatprep.subr.mxu0 0.0
    %2388 = vmatpush1.msra.mxu0 0.0
    %2389 = vmatprep.subr.mxu0 0.0
    %2390 = vmatpush1.msra.mxu0 0.0
    %2391 = vmatprep.subr.mxu0 0.0
    %2392 = vmatpush1.msra.mxu0 0.0
    %2393 = vmatprep.subr.mxu0 0.0
    %2394 = vmatpush1.msra.mxu0 0.0
    %2395 = vmatprep.subr.mxu0 0.0
    %2396 = vmatpush1.msra.mxu0 0.0
    %2397 = vmatprep.subr.mxu0 0.0
    %2398 = vmatpush1.msra.mxu0 0.0
    %2399 = vmatprep.subr.mxu0 0.0
    %2400 = vmatpush1.msra.mxu0 0.0
    %2401 = vmatprep.subr.mxu0 0.0
    %2402 = vmatpush1.msra.mxu0 0.0
    %2403 = vmatprep.subr.mxu0 0.0
    %2404 = vmatpush1.msra.mxu0 0.0
    %2405 = vmatprep.subr.mxu0 0.0
    %2406 = vmatpush1.msra.mxu0 0.0
    %2407 = vmatprep.subr.mxu0 0.0
    %2408 = vmatpush1.msra.mxu0 0.0
    %2409 = vmatprep.subr.mxu0 0.0
    %2410 = vmatpush1.msra.mxu0 0.0
    %2411 = vmatprep.subr.mxu0 0.0
    %2412 = vmatpush1.msra.mxu0 0.0
    %2413 = vmatprep.subr.mxu0 0.0
    %2414 = vmatpush1.msra.mxu0 0.0
    %2415 = vmatprep.subr.mxu0 0.0
    %2416 = vmatpush1.msra.mxu0 0.0
    %2417 = vmatprep.subr.mxu0 0.0
    %2418 = vmatpush1.msra.mxu0 0.0
    %2419 = vmatprep.subr.mxu0 0.0
    %2420 = vmatpush1.msra.mxu0 0.0
    %2421 = vmatprep.subr.mxu0 0.0
    %2422 = vmatpush1.msra.mxu0 0.0
    %2423 = vmatprep.subr.mxu0 0.0
    %2424 = vmatpush1.msra.mxu0 0.0
    %2425 = vmatprep.subr.mxu0 0.0
    %2426 = vmatpush1.msra.mxu0 0.0
    %2427 = vmatprep.subr.mxu0 0.0
    %2428 = vmatpush1.msra.mxu0 0.0
    %2429 = vmatprep.subr.mxu0 0.0
    %2430 = vmatpush1.msra.mxu0 0.0
    %2431 = vmatprep.subr.mxu0 0.0
    %2432 = vmatpush1.msra.mxu0 0.0
    %2433 = vmatprep.subr.mxu0 0.0
    %2434 = vmatpush1.msra.mxu0 0.0
    %2435 = vmatprep.subr.mxu0 0.0
    %2436 = vmatpush1.msra.mxu0 0.0
    %2437 = vmatprep.mubr.f32.mxu0 0.0
    %v2438 = vand.u32 %v2070, 4294901760
    %v2439 = vsub.f32 %v2070, %v2438
    %v2440 = vand.u32 %v2439, 4294901760
    %2441 = vmatmul.mubr.f32.gmra.mrb[0].mxu0 %v2440
    %v2442 = vpop.f32.mrb[0].mxu0
    %v2443 = vadd.f32 %v2353, %v2442
    %v2444 = vpop.f32.mrb[0].mxu0
    %2445 = vmatprep.mubr.f32.mxu0 0.0
    %v2446 = vand.u32 %v2073, 4294901760
    %v2447 = vsub.f32 %v2073, %v2446
    %v2448 = vand.u32 %v2447, 4294901760
    %2449 = vmatmul.mubr.f32.gmra.mrb[0].mxu0 %v2448
    %v2450 = vpop.f32.mrb[0].mxu0
    %v2451 = vadd.f32 %v2360, %v2450
    %v2452 = vpop.f32.mrb[0].mxu0
    %2453 = vmatprep.mubr.f32.mxu0 0.0
    %v2454 = vand.u32 %v2076, 4294901760
    %v2455 = vsub.f32 %v2076, %v2454
    %v2456 = vand.u32 %v2455, 4294901760
    %2457 = vmatmul.mubr.f32.gmra.mrb[0].mxu0 %v2456
    %v2458 = vpop.f32.mrb[0].mxu0
    %v2459 = vadd.f32 %v2367, %v2458
    %v2460 = vpop.f32.mrb[0].mxu0
    %2461 = vdwg.mxu0
    %2462 = vmatprep.subr.mxu0 0.0
    %v2463 = vand.u32 %v2044, 4294901760
    %v2464 = vsub.f32 %v2044, %v2463
    %v2465 = vand.u32 %v2464, 4294901760
    %2466 = vmatpush1.msra.mxu0 %v2465
    %2467 = vmatprep.subr.mxu0 0.0
    %v2468 = vand.u32 %v2045, 4294901760
    %v2469 = vsub.f32 %v2045, %v2468
    %v2470 = vand.u32 %v2469, 4294901760
    %2471 = vmatpush1.msra.mxu0 %v2470
    %2472 = vmatprep.subr.mxu0 0.0
    %v2473 = vand.u32 %v2080, 4294901760
    %v2474 = vsub.f32 %v2080, %v2473
    %v2475 = vand.u32 %v2474, 4294901760
    %2476 = vmatpush1.msra.mxu0 %v2475
    %2477 = vmatprep.subr.mxu0 0.0
    %2478 = vmatpush1.msra.mxu0 0.0
    %2479 = vmatprep.subr.mxu0 0.0
    %2480 = vmatpush1.msra.mxu0 0.0
    %2481 = vmatprep.subr.mxu0 0.0
    %2482 = vmatpush1.msra.mxu0 0.0
    %2483 = vmatprep.subr.mxu0 0.0
    %2484 = vmatpush1.msra.mxu0 0.0
    %2485 = vmatprep.subr.mxu0 0.0
    %2486 = vmatpush1.msra.mxu0 0.0
    %2487 = vmatprep.subr.mxu0 0.0
    %2488 = vmatpush1.msra.mxu0 0.0
    %2489 = vmatprep.subr.mxu0 0.0
    %2490 = vmatpush1.msra.mxu0 0.0
    %2491 = vmatprep.subr.mxu0 0.0
    %2492 = vmatpush1.msra.mxu0 0.0
    %2493 = vmatprep.subr.mxu0 0.0
    %2494 = vmatpush1.msra.mxu0 0.0
    %2495 = vmatprep.subr.mxu0 0.0
    %2496 = vmatpush1.msra.mxu0 0.0
    %2497 = vmatprep.subr.mxu0 0.0
    %2498 = vmatpush1.msra.mxu0 0.0
    %2499 = vmatprep.subr.mxu0 0.0
    %2500 = vmatpush1.msra.mxu0 0.0
    %2501 = vmatprep.subr.mxu0 0.0
    %2502 = vmatpush1.msra.mxu0 0.0
    %2503 = vmatprep.subr.mxu0 0.0
    %2504 = vmatpush1.msra.mxu0 0.0
    %2505 = vmatprep.subr.mxu0 0.0
    %2506 = vmatpush1.msra.mxu0 0.0
    %2507 = vmatprep.subr.mxu0 0.0
    %2508 = vmatpush1.msra.mxu0 0.0
    %2509 = vmatprep.subr.mxu0 0.0
    %2510 = vmatpush1.msra.mxu0 0.0
    %2511 = vmatprep.subr.mxu0 0.0
    %2512 = vmatpush1.msra.mxu0 0.0
    %2513 = vmatprep.subr.mxu0 0.0
    %2514 = vmatpush1.msra.mxu0 0.0
    %2515 = vmatprep.subr.mxu0 0.0
    %2516 = vmatpush1.msra.mxu0 0.0
    %2517 = vmatprep.subr.mxu0 0.0
    %2518 = vmatpush1.msra.mxu0 0.0
    %2519 = vmatprep.subr.mxu0 0.0
    %2520 = vmatpush1.msra.mxu0 0.0
    %2521 = vmatprep.subr.mxu0 0.0
    %2522 = vmatpush1.msra.mxu0 0.0
    %2523 = vmatprep.subr.mxu0 0.0
    %2524 = vmatpush1.msra.mxu0 0.0
    %2525 = vmatprep.subr.mxu0 0.0
    %2526 = vmatpush1.msra.mxu0 0.0
    %2527 = vmatprep.subr.mxu0 0.0
    %2528 = vmatpush1.msra.mxu0 0.0
    %2529 = vmatprep.subr.mxu0 0.0
    %2530 = vmatpush1.msra.mxu0 0.0
    %2531 = vmatprep.subr.mxu0 0.0
    %2532 = vmatpush1.msra.mxu0 0.0
    %2533 = vmatprep.subr.mxu0 0.0
    %2534 = vmatpush1.msra.mxu0 0.0
    %2535 = vmatprep.mubr.f32.mxu0 0.0
    %v2536 = vand.u32 %v2070, 4294901760
    %2537 = vmatmul.mubr.f32.gmra.mrb[0].mxu0 %v2536
    %v2538 = vpop.f32.mrb[0].mxu0
    %v2539 = vadd.f32 %v2443, %v2538
    %v2540 = vpop.f32.mrb[0].mxu0
    %2541 = vmatprep.mubr.f32.mxu0 0.0
    %v2542 = vand.u32 %v2073, 4294901760
    %2543 = vmatmul.mubr.f32.gmra.mrb[0].mxu0 %v2542
    %v2544 = vpop.f32.mrb[0].mxu0
    %v2545 = vadd.f32 %v2451, %v2544
    %v2546 = vpop.f32.mrb[0].mxu0
    %2547 = vmatprep.mubr.f32.mxu0 0.0
    %v2548 = vand.u32 %v2076, 4294901760
    %2549 = vmatmul.mubr.f32.gmra.mrb[0].mxu0 %v2548
    %v2550 = vpop.f32.mrb[0].mxu0
    %v2551 = vadd.f32 %v2459, %v2550
    %v2552 = vpop.f32.mrb[0].mxu0
    %2553 = vdwg.mxu0
    %2554 = vmatprep.subr.mxu0 0.0
    %v2555 = vand.u32 %v2044, 4294901760
    %2556 = vmatpush1.msra.mxu0 %v2555
    %2557 = vmatprep.subr.mxu0 0.0
    %v2558 = vand.u32 %v2045, 4294901760
    %2559 = vmatpush1.msra.mxu0 %v2558
    %2560 = vmatprep.subr.mxu0 0.0
    %v2561 = vand.u32 %v2080, 4294901760
    %2562 = vmatpush1.msra.mxu0 %v2561
    %2563 = vmatprep.subr.mxu0 0.0
    %2564 = vmatpush1.msra.mxu0 0.0
    %2565 = vmatprep.subr.mxu0 0.0
    %2566 = vmatpush1.msra.mxu0 0.0
    %2567 = vmatprep.subr.mxu0 0.0
    %2568 = vmatpush1.msra.mxu0 0.0
    %2569 = vmatprep.subr.mxu0 0.0
    %2570 = vmatpush1.msra.mxu0 0.0
    %2571 = vmatprep.subr.mxu0 0.0
    %2572 = vmatpush1.msra.mxu0 0.0
    %2573 = vmatprep.subr.mxu0 0.0
    %2574 = vmatpush1.msra.mxu0 0.0
    %2575 = vmatprep.subr.mxu0 0.0
    %2576 = vmatpush1.msra.mxu0 0.0
    %2577 = vmatprep.subr.mxu0 0.0
    %2578 = vmatpush1.msra.mxu0 0.0
    %2579 = vmatprep.subr.mxu0 0.0
    %2580 = vmatpush1.msra.mxu0 0.0
    %2581 = vmatprep.subr.mxu0 0.0
    %2582 = vmatpush1.msra.mxu0 0.0
    %2583 = vmatprep.subr.mxu0 0.0
    %2584 = vmatpush1.msra.mxu0 0.0
    %2585 = vmatprep.subr.mxu0 0.0
    %2586 = vmatpush1.msra.mxu0 0.0
    %2587 = vmatprep.subr.mxu0 0.0
    %2588 = vmatpush1.msra.mxu0 0.0
    %2589 = vmatprep.subr.mxu0 0.0
    %2590 = vmatpush1.msra.mxu0 0.0
    %2591 = vmatprep.subr.mxu0 0.0
    %2592 = vmatpush1.msra.mxu0 0.0
    %2593 = vmatprep.subr.mxu0 0.0
    %2594 = vmatpush1.msra.mxu0 0.0
    %2595 = vmatprep.subr.mxu0 0.0
    %2596 = vmatpush1.msra.mxu0 0.0
    %2597 = vmatprep.subr.mxu0 0.0
    %2598 = vmatpush1.msra.mxu0 0.0
    %2599 = vmatprep.subr.mxu0 0.0
    %2600 = vmatpush1.msra.mxu0 0.0
    %2601 = vmatprep.subr.mxu0 0.0
    %2602 = vmatpush1.msra.mxu0 0.0
    %2603 = vmatprep.subr.mxu0 0.0
    %2604 = vmatpush1.msra.mxu0 0.0
    %2605 = vmatprep.subr.mxu0 0.0
    %2606 = vmatpush1.msra.mxu0 0.0
    %2607 = vmatprep.subr.mxu0 0.0
    %2608 = vmatpush1.msra.mxu0 0.0
    %2609 = vmatprep.subr.mxu0 0.0
    %2610 = vmatpush1.msra.mxu0 0.0
    %2611 = vmatprep.subr.mxu0 0.0
    %2612 = vmatpush1.msra.mxu0 0.0
    %2613 = vmatprep.subr.mxu0 0.0
    %2614 = vmatpush1.msra.mxu0 0.0
    %2615 = vmatprep.subr.mxu0 0.0
    %2616 = vmatpush1.msra.mxu0 0.0
    %2617 = vmatprep.subr.mxu0 0.0
    %2618 = vmatpush1.msra.mxu0 0.0
    %2619 = vmatprep.subr.mxu0 0.0
    %2620 = vmatpush1.msra.mxu0 0.0
    %2621 = vmatprep.mubr.f32.mxu0 0.0
    %v2622 = vand.u32 %v2070, 4294901760
    %2623 = vmatmul.mubr.f32.gmra.mrb[0].mxu0 %v2622
    %v2624 = vpop.f32.mrb[0].mxu0
    %v2625 = vadd.f32 %v2539, %v2624
    %v2626 = vpop.f32.mrb[0].mxu0
    %2627 = vmatprep.mubr.f32.mxu0 0.0
    %v2628 = vand.u32 %v2073, 4294901760
    %2629 = vmatmul.mubr.f32.gmra.mrb[0].mxu0 %v2628
    %v2630 = vpop.f32.mrb[0].mxu0
    %v2631 = vadd.f32 %v2545, %v2630
    %v2632 = vpop.f32.mrb[0].mxu0
    %2633 = vmatprep.mubr.f32.mxu0 0.0
    %v2634 = vand.u32 %v2076, 4294901760
    %2635 = vmatmul.mubr.f32.gmra.mrb[0].mxu0 %v2634
    %v2636 = vpop.f32.mrb[0].mxu0
    %v2637 = vadd.f32 %v2551, %v2636
    %v2638 = vpop.f32.mrb[0].mxu0
    %2639 = vdwg.mxu0
    %v2640 = vtanh.pop %v2625
    %v2641 = vtanh.pop %v2631
    %v2642 = vtanh.pop %v2637
    %v2643 = vld [vmem:[#allocation2 + $0x100] sm:$0x3]
    %v2644 = vld [vmem:[#allocation2 + $0x108] sm:$0x3]
    %2646 = vset.pattern.permute.xlu0 0
    %2647 = vperm.xlu0 %2646, %v2644
    %v2648 = vpop.permute.xlu0 %2647
    %v2651 = vsel %vm2068, %v2643, 0
    %v2654 = vsel %vm2078, %v2642, 0
    %2656 = vmatprep.subr.mxu0 0.0
    %v2657 = vand.u32 %v2640, 4294901760
    %2658 = vmatpush1.msra.mxu0 %v2657
    %2659 = vmatprep.subr.mxu0 0.0
    %v2660 = vand.u32 %v2641, 4294901760
    %2661 = vmatpush1.msra.mxu0 %v2660
    %2662 = vmatprep.subr.mxu0 0.0
    %v2663 = vand.u32 %v2654, 4294901760
    %2664 = vmatpush1.msra.mxu0 %v2663
    %2665 = vmatprep.subr.mxu0 0.0
    %2666 = vmatpush1.msra.mxu0 0.0
    %2667 = vmatprep.subr.mxu0 0.0
    %2668 = vmatpush1.msra.mxu0 0.0
    %2669 = vmatprep.subr.mxu0 0.0
    %2670 = vmatpush1.msra.mxu0 0.0
    %2671 = vmatprep.subr.mxu0 0.0
    %2672 = vmatpush1.msra.mxu0 0.0
    %2673 = vmatprep.subr.mxu0 0.0
    %2674 = vmatpush1.msra.mxu0 0.0
    %2675 = vmatprep.subr.mxu0 0.0
    %2676 = vmatpush1.msra.mxu0 0.0
    %2677 = vmatprep.subr.mxu0 0.0
    %2678 = vmatpush1.msra.mxu0 0.0
    %2679 = vmatprep.subr.mxu0 0.0
    %2680 = vmatpush1.msra.mxu0 0.0
    %2681 = vmatprep.subr.mxu0 0.0
    %2682 = vmatpush1.msra.mxu0 0.0
    %2683 = vmatprep.subr.mxu0 0.0
    %2684 = vmatpush1.msra.mxu0 0.0
    %2685 = vmatprep.subr.mxu0 0.0
    %2686 = vmatpush1.msra.mxu0 0.0
    %2687 = vmatprep.subr.mxu0 0.0
    %2688 = vmatpush1.msra.mxu0 0.0
    %2689 = vmatprep.subr.mxu0 0.0
    %2690 = vmatpush1.msra.mxu0 0.0
    %2691 = vmatprep.subr.mxu0 0.0
    %2692 = vmatpush1.msra.mxu0 0.0
    %2693 = vmatprep.subr.mxu0 0.0
    %2694 = vmatpush1.msra.mxu0 0.0
    %2695 = vmatprep.subr.mxu0 0.0
    %2696 = vmatpush1.msra.mxu0 0.0
    %2697 = vmatprep.subr.mxu0 0.0
    %2698 = vmatpush1.msra.mxu0 0.0
    %2699 = vmatprep.subr.mxu0 0.0
    %2700 = vmatpush1.msra.mxu0 0.0
    %2701 = vmatprep.subr.mxu0 0.0
    %2702 = vmatpush1.msra.mxu0 0.0
    %2703 = vmatprep.subr.mxu0 0.0
    %2704 = vmatpush1.msra.mxu0 0.0
    %2705 = vmatprep.subr.mxu0 0.0
    %2706 = vmatpush1.msra.mxu0 0.0
    %2707 = vmatprep.subr.mxu0 0.0
    %2708 = vmatpush1.msra.mxu0 0.0
    %2709 = vmatprep.subr.mxu0 0.0
    %2710 = vmatpush1.msra.mxu0 0.0
    %2711 = vmatprep.subr.mxu0 0.0
    %2712 = vmatpush1.msra.mxu0 0.0
    %2713 = vmatprep.subr.mxu0 0.0
    %2714 = vmatpush1.msra.mxu0 0.0
    %2715 = vmatprep.subr.mxu0 0.0
    %2716 = vmatpush1.msra.mxu0 0.0
    %2717 = vmatprep.subr.mxu0 0.0
    %2718 = vmatpush1.msra.mxu0 0.0
    %2719 = vmatprep.subr.mxu0 0.0
    %2720 = vmatpush1.msra.mxu0 0.0
    %2721 = vmatprep.subr.mxu0 0.0
    %2722 = vmatpush1.msra.mxu0 0.0
    %2723 = vmatprep.mubr.f32.mxu0 0.0
    %v2724 = vand.u32 %v2651, 4294901760
    %v2725 = vsub.f32 %v2651, %v2724
    %v2726 = vand.u32 %v2725, 4294901760
    %v2727 = vsub.f32 %v2725, %v2726
    %v2728 = vand.u32 %v2727, 4294901760
    %2729 = vmatmul.mubr.f32.gmra.mrb[0].mxu0 %v2728
    %v2730 = vpop.f32.mrb[0].mxu0
    %v2731 = vadd.f32 %v2648, %v2730
    %v2732 = vpop.f32.mrb[0].mxu0
    %2733 = vdwg.mxu0
    %2734 = vmatprep.subr.mxu0 0.0
    %v2735 = vand.u32 %v2640, 4294901760
    %v2736 = vsub.f32 %v2640, %v2735
    %v2737 = vand.u32 %v2736, 4294901760
    %v2738 = vsub.f32 %v2736, %v2737
    %v2739 = vand.u32 %v2738, 4294901760
    %2740 = vmatpush1.msra.mxu0 %v2739
    %2741 = vmatprep.subr.mxu0 0.0
    %v2742 = vand.u32 %v2641, 4294901760
    %v2743 = vsub.f32 %v2641, %v2742
    %v2744 = vand.u32 %v2743, 4294901760
    %v2745 = vsub.f32 %v2743, %v2744
    %v2746 = vand.u32 %v2745, 4294901760
    %2747 = vmatpush1.msra.mxu0 %v2746
    %2748 = vmatprep.subr.mxu0 0.0
    %v2749 = vand.u32 %v2654, 4294901760
    %v2750 = vsub.f32 %v2654, %v2749
    %v2751 = vand.u32 %v2750, 4294901760
    %v2752 = vsub.f32 %v2750, %v2751
    %v2753 = vand.u32 %v2752, 4294901760
    %2754 = vmatpush1.msra.mxu0 %v2753
    %2755 = vmatprep.subr.mxu0 0.0
    %2756 = vmatpush1.msra.mxu0 0.0
    %2757 = vmatprep.subr.mxu0 0.0
    %2758 = vmatpush1.msra.mxu0 0.0
    %2759 = vmatprep.subr.mxu0 0.0
    %2760 = vmatpush1.msra.mxu0 0.0
    %2761 = vmatprep.subr.mxu0 0.0
    %2762 = vmatpush1.msra.mxu0 0.0
    %2763 = vmatprep.subr.mxu0 0.0
    %2764 = vmatpush1.msra.mxu0 0.0
    %2765 = vmatprep.subr.mxu0 0.0
    %2766 = vmatpush1.msra.mxu0 0.0
    %2767 = vmatprep.subr.mxu0 0.0
    %2768 = vmatpush1.msra.mxu0 0.0
    %2769 = vmatprep.subr.mxu0 0.0
    %2770 = vmatpush1.msra.mxu0 0.0
    %2771 = vmatprep.subr.mxu0 0.0
    %2772 = vmatpush1.msra.mxu0 0.0
    %2773 = vmatprep.subr.mxu0 0.0
    %2774 = vmatpush1.msra.mxu0 0.0
    %2775 = vmatprep.subr.mxu0 0.0
    %2776 = vmatpush1.msra.mxu0 0.0
    %2777 = vmatprep.subr.mxu0 0.0
    %2778 = vmatpush1.msra.mxu0 0.0
    %2779 = vmatprep.subr.mxu0 0.0
    %2780 = vmatpush1.msra.mxu0 0.0
    %2781 = vmatprep.subr.mxu0 0.0
    %2782 = vmatpush1.msra.mxu0 0.0
    %2783 = vmatprep.subr.mxu0 0.0
    %2784 = vmatpush1.msra.mxu0 0.0
    %2785 = vmatprep.subr.mxu0 0.0
    %2786 = vmatpush1.msra.mxu0 0.0
    %2787 = vmatprep.subr.mxu0 0.0
    %2788 = vmatpush1.msra.mxu0 0.0
    %2789 = vmatprep.subr.mxu0 0.0
    %2790 = vmatpush1.msra.mxu0 0.0
    %2791 = vmatprep.subr.mxu0 0.0
    %2792 = vmatpush1.msra.mxu0 0.0
    %2793 = vmatprep.subr.mxu0 0.0
    %2794 = vmatpush1.msra.mxu0 0.0
    %2795 = vmatprep.subr.mxu0 0.0
    %2796 = vmatpush1.msra.mxu0 0.0
    %2797 = vmatprep.subr.mxu0 0.0
    %2798 = vmatpush1.msra.mxu0 0.0
    %2799 = vmatprep.subr.mxu0 0.0
    %2800 = vmatpush1.msra.mxu0 0.0
    %2801 = vmatprep.subr.mxu0 0.0
    %2802 = vmatpush1.msra.mxu0 0.0
    %2803 = vmatprep.subr.mxu0 0.0
    %2804 = vmatpush1.msra.mxu0 0.0
    %2805 = vmatprep.subr.mxu0 0.0
    %2806 = vmatpush1.msra.mxu0 0.0
    %2807 = vmatprep.subr.mxu0 0.0
    %2808 = vmatpush1.msra.mxu0 0.0
    %2809 = vmatprep.subr.mxu0 0.0
    %2810 = vmatpush1.msra.mxu0 0.0
    %2811 = vmatprep.subr.mxu0 0.0
    %2812 = vmatpush1.msra.mxu0 0.0
    %2813 = vmatprep.mubr.f32.mxu0 0.0
    %v2814 = vand.u32 %v2651, 4294901760
    %2815 = vmatmul.mubr.f32.gmra.mrb[0].mxu0 %v2814
    %v2816 = vpop.f32.mrb[0].mxu0
    %v2817 = vadd.f32 %v2731, %v2816
    %v2818 = vpop.f32.mrb[0].mxu0
    %2819 = vdwg.mxu0
    %2820 = vmatprep.subr.mxu0 0.0
    %v2821 = vand.u32 %v2640, 4294901760
    %v2822 = vsub.f32 %v2640, %v2821
    %2823 = vmatpush1.msra.mxu0 %v2822
    %2824 = vmatprep.subr.mxu0 0.0
    %v2825 = vand.u32 %v2641, 4294901760
    %v2826 = vsub.f32 %v2641, %v2825
    %2827 = vmatpush1.msra.mxu0 %v2826
    %2828 = vmatprep.subr.mxu0 0.0
    %v2829 = vand.u32 %v2654, 4294901760
    %v2830 = vsub.f32 %v2654, %v2829
    %2831 = vmatpush1.msra.mxu0 %v2830
    %2832 = vmatprep.subr.mxu0 0.0
    %2833 = vmatpush1.msra.mxu0 0.0
    %2834 = vmatprep.subr.mxu0 0.0
    %2835 = vmatpush1.msra.mxu0 0.0
    %2836 = vmatprep.subr.mxu0 0.0
    %2837 = vmatpush1.msra.mxu0 0.0
    %2838 = vmatprep.subr.mxu0 0.0
    %2839 = vmatpush1.msra.mxu0 0.0
    %2840 = vmatprep.subr.mxu0 0.0
    %2841 = vmatpush1.msra.mxu0 0.0
    %2842 = vmatprep.subr.mxu0 0.0
    %2843 = vmatpush1.msra.mxu0 0.0
    %2844 = vmatprep.subr.mxu0 0.0
    %2845 = vmatpush1.msra.mxu0 0.0
    %2846 = vmatprep.subr.mxu0 0.0
    %2847 = vmatpush1.msra.mxu0 0.0
    %2848 = vmatprep.subr.mxu0 0.0
    %2849 = vmatpush1.msra.mxu0 0.0
    %2850 = vmatprep.subr.mxu0 0.0
    %2851 = vmatpush1.msra.mxu0 0.0
    %2852 = vmatprep.subr.mxu0 0.0
    %2853 = vmatpush1.msra.mxu0 0.0
    %2854 = vmatprep.subr.mxu0 0.0
    %2855 = vmatpush1.msra.mxu0 0.0
    %2856 = vmatprep.subr.mxu0 0.0
    %2857 = vmatpush1.msra.mxu0 0.0
    %2858 = vmatprep.subr.mxu0 0.0
    %2859 = vmatpush1.msra.mxu0 0.0
    %2860 = vmatprep.subr.mxu0 0.0
    %2861 = vmatpush1.msra.mxu0 0.0
    %2862 = vmatprep.subr.mxu0 0.0
    %2863 = vmatpush1.msra.mxu0 0.0
    %2864 = vmatprep.subr.mxu0 0.0
    %2865 = vmatpush1.msra.mxu0 0.0
    %2866 = vmatprep.subr.mxu0 0.0
    %2867 = vmatpush1.msra.mxu0 0.0
    %2868 = vmatprep.subr.mxu0 0.0
    %2869 = vmatpush1.msra.mxu0 0.0
    %2870 = vmatprep.subr.mxu0 0.0
    %2871 = vmatpush1.msra.mxu0 0.0
    %2872 = vmatprep.subr.mxu0 0.0
    %2873 = vmatpush1.msra.mxu0 0.0
    %2874 = vmatprep.subr.mxu0 0.0
    %2875 = vmatpush1.msra.mxu0 0.0
    %2876 = vmatprep.subr.mxu0 0.0
    %2877 = vmatpush1.msra.mxu0 0.0
    %2878 = vmatprep.subr.mxu0 0.0
    %2879 = vmatpush1.msra.mxu0 0.0
    %2880 = vmatprep.subr.mxu0 0.0
    %2881 = vmatpush1.msra.mxu0 0.0
    %2882 = vmatprep.subr.mxu0 0.0
    %2883 = vmatpush1.msra.mxu0 0.0
    %2884 = vmatprep.subr.mxu0 0.0
    %2885 = vmatpush1.msra.mxu0 0.0
    %2886 = vmatprep.subr.mxu0 0.0
    %2887 = vmatpush1.msra.mxu0 0.0
    %2888 = vmatprep.subr.mxu0 0.0
    %2889 = vmatpush1.msra.mxu0 0.0
    %2890 = vmatprep.mubr.f32.mxu0 0.0
    %v2891 = vand.u32 %v2651, 4294901760
    %v2892 = vsub.f32 %v2651, %v2891
    %2893 = vmatmul.mubr.f32.gmra.mrb[0].mxu0 %v2892
    %v2894 = vpop.f32.mrb[0].mxu0
    %v2895 = vadd.f32 %v2817, %v2894
    %v2896 = vpop.f32.mrb[0].mxu0
    %2897 = vdwg.mxu0
    %2898 = vmatprep.subr.mxu0 0.0
    %v2899 = vand.u32 %v2640, 4294901760
    %2900 = vmatpush1.msra.mxu0 %v2899
    %2901 = vmatprep.subr.mxu0 0.0
    %v2902 = vand.u32 %v2641, 4294901760
    %2903 = vmatpush1.msra.mxu0 %v2902
    %2904 = vmatprep.subr.mxu0 0.0
    %v2905 = vand.u32 %v2654, 4294901760
    %2906 = vmatpush1.msra.mxu0 %v2905
    %2907 = vmatprep.subr.mxu0 0.0
    %2908 = vmatpush1.msra.mxu0 0.0
    %2909 = vmatprep.subr.mxu0 0.0
    %2910 = vmatpush1.msra.mxu0 0.0
    %2911 = vmatprep.subr.mxu0 0.0
    %2912 = vmatpush1.msra.mxu0 0.0
    %2913 = vmatprep.subr.mxu0 0.0
    %2914 = vmatpush1.msra.mxu0 0.0
    %2915 = vmatprep.subr.mxu0 0.0
    %2916 = vmatpush1.msra.mxu0 0.0
    %2917 = vmatprep.subr.mxu0 0.0
    %2918 = vmatpush1.msra.mxu0 0.0
    %2919 = vmatprep.subr.mxu0 0.0
    %2920 = vmatpush1.msra.mxu0 0.0
    %2921 = vmatprep.subr.mxu0 0.0
    %2922 = vmatpush1.msra.mxu0 0.0
    %2923 = vmatprep.subr.mxu0 0.0
    %2924 = vmatpush1.msra.mxu0 0.0
    %2925 = vmatprep.subr.mxu0 0.0
    %2926 = vmatpush1.msra.mxu0 0.0
    %2927 = vmatprep.subr.mxu0 0.0
    %2928 = vmatpush1.msra.mxu0 0.0
    %2929 = vmatprep.subr.mxu0 0.0
    %2930 = vmatpush1.msra.mxu0 0.0
    %2931 = vmatprep.subr.mxu0 0.0
    %2932 = vmatpush1.msra.mxu0 0.0
    %2933 = vmatprep.subr.mxu0 0.0
    %2934 = vmatpush1.msra.mxu0 0.0
    %2935 = vmatprep.subr.mxu0 0.0
    %2936 = vmatpush1.msra.mxu0 0.0
    %2937 = vmatprep.subr.mxu0 0.0
    %2938 = vmatpush1.msra.mxu0 0.0
    %2939 = vmatprep.subr.mxu0 0.0
    %2940 = vmatpush1.msra.mxu0 0.0
    %2941 = vmatprep.subr.mxu0 0.0
    %2942 = vmatpush1.msra.mxu0 0.0
    %2943 = vmatprep.subr.mxu0 0.0
    %2944 = vmatpush1.msra.mxu0 0.0
    %2945 = vmatprep.subr.mxu0 0.0
    %2946 = vmatpush1.msra.mxu0 0.0
    %2947 = vmatprep.subr.mxu0 0.0
    %2948 = vmatpush1.msra.mxu0 0.0
    %2949 = vmatprep.subr.mxu0 0.0
    %2950 = vmatpush1.msra.mxu0 0.0
    %2951 = vmatprep.subr.mxu0 0.0
    %2952 = vmatpush1.msra.mxu0 0.0
    %2953 = vmatprep.subr.mxu0 0.0
    %2954 = vmatpush1.msra.mxu0 0.0
    %2955 = vmatprep.subr.mxu0 0.0
    %2956 = vmatpush1.msra.mxu0 0.0
    %2957 = vmatprep.subr.mxu0 0.0
    %2958 = vmatpush1.msra.mxu0 0.0
    %2959 = vmatprep.subr.mxu0 0.0
    %2960 = vmatpush1.msra.mxu0 0.0
    %2961 = vmatprep.subr.mxu0 0.0
    %2962 = vmatpush1.msra.mxu0 0.0
    %2963 = vmatprep.subr.mxu0 0.0
    %2964 = vmatpush1.msra.mxu0 0.0
    %2965 = vmatprep.mubr.f32.mxu0 0.0
    %v2966 = vand.u32 %v2651, 4294901760
    %v2967 = vsub.f32 %v2651, %v2966
    %v2968 = vand.u32 %v2967, 4294901760
    %2969 = vmatmul.mubr.f32.gmra.mrb[0].mxu0 %v2968
    %v2970 = vpop.f32.mrb[0].mxu0
    %v2971 = vadd.f32 %v2895, %v2970
    %v2972 = vpop.f32.mrb[0].mxu0
    %2973 = vdwg.mxu0
    %2974 = vmatprep.subr.mxu0 0.0
    %v2975 = vand.u32 %v2640, 4294901760
    %v2976 = vsub.f32 %v2640, %v2975
    %v2977 = vand.u32 %v2976, 4294901760
    %2978 = vmatpush1.msra.mxu0 %v2977
    %2979 = vmatprep.subr.mxu0 0.0
    %v2980 = vand.u32 %v2641, 4294901760
    %v2981 = vsub.f32 %v2641, %v2980
    %v2982 = vand.u32 %v2981, 4294901760
    %2983 = vmatpush1.msra.mxu0 %v2982
    %2984 = vmatprep.subr.mxu0 0.0
    %v2985 = vand.u32 %v2654, 4294901760
    %v2986 = vsub.f32 %v2654, %v2985
    %v2987 = vand.u32 %v2986, 4294901760
    %2988 = vmatpush1.msra.mxu0 %v2987
    %2989 = vmatprep.subr.mxu0 0.0
    %2990 = vmatpush1.msra.mxu0 0.0
    %2991 = vmatprep.subr.mxu0 0.0
    %2992 = vmatpush1.msra.mxu0 0.0
    %2993 = vmatprep.subr.mxu0 0.0
    %2994 = vmatpush1.msra.mxu0 0.0
    %2995 = vmatprep.subr.mxu0 0.0
    %2996 = vmatpush1.msra.mxu0 0.0
    %2997 = vmatprep.subr.mxu0 0.0
    %2998 = vmatpush1.msra.mxu0 0.0
    %2999 = vmatprep.subr.mxu0 0.0
    %3000 = vmatpush1.msra.mxu0 0.0
    %3001 = vmatprep.subr.mxu0 0.0
    %3002 = vmatpush1.msra.mxu0 0.0
    %3003 = vmatprep.subr.mxu0 0.0
    %3004 = vmatpush1.msra.mxu0 0.0
    %3005 = vmatprep.subr.mxu0 0.0
    %3006 = vmatpush1.msra.mxu0 0.0
    %3007 = vmatprep.subr.mxu0 0.0
    %3008 = vmatpush1.msra.mxu0 0.0
    %3009 = vmatprep.subr.mxu0 0.0
    %3010 = vmatpush1.msra.mxu0 0.0
    %3011 = vmatprep.subr.mxu0 0.0
    %3012 = vmatpush1.msra.mxu0 0.0
    %3013 = vmatprep.subr.mxu0 0.0
    %3014 = vmatpush1.msra.mxu0 0.0
    %3015 = vmatprep.subr.mxu0 0.0
    %3016 = vmatpush1.msra.mxu0 0.0
    %3017 = vmatprep.subr.mxu0 0.0
    %3018 = vmatpush1.msra.mxu0 0.0
    %3019 = vmatprep.subr.mxu0 0.0
    %3020 = vmatpush1.msra.mxu0 0.0
    %3021 = vmatprep.subr.mxu0 0.0
    %3022 = vmatpush1.msra.mxu0 0.0
    %3023 = vmatprep.subr.mxu0 0.0
    %3024 = vmatpush1.msra.mxu0 0.0
    %3025 = vmatprep.subr.mxu0 0.0
    %3026 = vmatpush1.msra.mxu0 0.0
    %3027 = vmatprep.subr.mxu0 0.0
    %3028 = vmatpush1.msra.mxu0 0.0
    %3029 = vmatprep.subr.mxu0 0.0
    %3030 = vmatpush1.msra.mxu0 0.0
    %3031 = vmatprep.subr.mxu0 0.0
    %3032 = vmatpush1.msra.mxu0 0.0
    %3033 = vmatprep.subr.mxu0 0.0
    %3034 = vmatpush1.msra.mxu0 0.0
    %3035 = vmatprep.subr.mxu0 0.0
    %3036 = vmatpush1.msra.mxu0 0.0
    %3037 = vmatprep.subr.mxu0 0.0
    %3038 = vmatpush1.msra.mxu0 0.0
    %3039 = vmatprep.subr.mxu0 0.0
    %3040 = vmatpush1.msra.mxu0 0.0
    %3041 = vmatprep.subr.mxu0 0.0
    %3042 = vmatpush1.msra.mxu0 0.0
    %3043 = vmatprep.subr.mxu0 0.0
    %3044 = vmatpush1.msra.mxu0 0.0
    %3045 = vmatprep.subr.mxu0 0.0
    %3046 = vmatpush1.msra.mxu0 0.0
    %3047 = vmatprep.mubr.f32.mxu0 0.0
    %v3048 = vand.u32 %v2651, 4294901760
    %3049 = vmatmul.mubr.f32.gmra.mrb[0].mxu0 %v3048
    %v3050 = vpop.f32.mrb[0].mxu0
    %v3051 = vadd.f32 %v2971, %v3050
    %v3052 = vpop.f32.mrb[0].mxu0
    %3053 = vdwg.mxu0
    %3054 = vmatprep.subr.mxu0 0.0
    %v3055 = vand.u32 %v2640, 4294901760
    %3056 = vmatpush1.msra.mxu0 %v3055
    %3057 = vmatprep.subr.mxu0 0.0
    %v3058 = vand.u32 %v2641, 4294901760
    %3059 = vmatpush1.msra.mxu0 %v3058
    %3060 = vmatprep.subr.mxu0 0.0
    %v3061 = vand.u32 %v2654, 4294901760
    %3062 = vmatpush1.msra.mxu0 %v3061
    %3063 = vmatprep.subr.mxu0 0.0
    %3064 = vmatpush1.msra.mxu0 0.0
    %3065 = vmatprep.subr.mxu0 0.0
    %3066 = vmatpush1.msra.mxu0 0.0
    %3067 = vmatprep.subr.mxu0 0.0
    %3068 = vmatpush1.msra.mxu0 0.0
    %3069 = vmatprep.subr.mxu0 0.0
    %3070 = vmatpush1.msra.mxu0 0.0
    %3071 = vmatprep.subr.mxu0 0.0
    %3072 = vmatpush1.msra.mxu0 0.0
    %3073 = vmatprep.subr.mxu0 0.0
    %3074 = vmatpush1.msra.mxu0 0.0
    %3075 = vmatprep.subr.mxu0 0.0
    %3076 = vmatpush1.msra.mxu0 0.0
    %3077 = vmatprep.subr.mxu0 0.0
    %3078 = vmatpush1.msra.mxu0 0.0
    %3079 = vmatprep.subr.mxu0 0.0
    %3080 = vmatpush1.msra.mxu0 0.0
    %3081 = vmatprep.subr.mxu0 0.0
    %3082 = vmatpush1.msra.mxu0 0.0
    %3083 = vmatprep.subr.mxu0 0.0
    %3084 = vmatpush1.msra.mxu0 0.0
    %3085 = vmatprep.subr.mxu0 0.0
    %3086 = vmatpush1.msra.mxu0 0.0
    %3087 = vmatprep.subr.mxu0 0.0
    %3088 = vmatpush1.msra.mxu0 0.0
    %3089 = vmatprep.subr.mxu0 0.0
    %3090 = vmatpush1.msra.mxu0 0.0
    %3091 = vmatprep.subr.mxu0 0.0
    %3092 = vmatpush1.msra.mxu0 0.0
    %3093 = vmatprep.subr.mxu0 0.0
    %3094 = vmatpush1.msra.mxu0 0.0
    %3095 = vmatprep.subr.mxu0 0.0
    %3096 = vmatpush1.msra.mxu0 0.0
    %3097 = vmatprep.subr.mxu0 0.0
    %3098 = vmatpush1.msra.mxu0 0.0
    %3099 = vmatprep.subr.mxu0 0.0
    %3100 = vmatpush1.msra.mxu0 0.0
    %3101 = vmatprep.subr.mxu0 0.0
    %3102 = vmatpush1.msra.mxu0 0.0
    %3103 = vmatprep.subr.mxu0 0.0
    %3104 = vmatpush1.msra.mxu0 0.0
    %3105 = vmatprep.subr.mxu0 0.0
    %3106 = vmatpush1.msra.mxu0 0.0
    %3107 = vmatprep.subr.mxu0 0.0
    %3108 = vmatpush1.msra.mxu0 0.0
    %3109 = vmatprep.subr.mxu0 0.0
    %3110 = vmatpush1.msra.mxu0 0.0
    %3111 = vmatprep.subr.mxu0 0.0
    %3112 = vmatpush1.msra.mxu0 0.0
    %3113 = vmatprep.subr.mxu0 0.0
    %3114 = vmatpush1.msra.mxu0 0.0
    %3115 = vmatprep.subr.mxu0 0.0
    %3116 = vmatpush1.msra.mxu0 0.0
    %3117 = vmatprep.subr.mxu0 0.0
    %3118 = vmatpush1.msra.mxu0 0.0
    %3119 = vmatprep.subr.mxu0 0.0
    %3120 = vmatpush1.msra.mxu0 0.0
    %3121 = vmatprep.mubr.f32.mxu0 0.0
    %v3122 = vand.u32 %v2651, 4294901760
    %3123 = vmatmul.mubr.f32.gmra.mrb[0].mxu0 %v3122
    %v3124 = vpop.f32.mrb[0].mxu0
    %v3125 = vadd.f32 %v3051, %v3124
    %v3126 = vpop.f32.mrb[0].mxu0
    %3127 = vdwg.mxu0
    %3128 = vst [vmem:[%s2] sm:$0x3] %v3125
    // Predicated region
    $region14: #{discriminator_forward.1} parent=1 // pred_check
      _
    $region15: #{discriminator_forward.1} parent=1 // pred_check_branch
      %3130 = sbr.rel (0) target = $region17
    $region16: #{discriminator_forward.1} parent=1 // pred_region
      _
    $region17: #{discriminator_forward.1} parent=1 // pred_fallthru
      _
    // Predicated region
    $region18: #{discriminator_forward.1} parent=1 // pred_check
      _
    $region19: #{discriminator_forward.1} parent=1 // pred_check_branch
      %3132 = sbr.rel (0) target = $region21
    $region20: #{discriminator_forward.1} parent=1 // pred_region
      _
    $region21: #{discriminator_forward.1} parent=1 // pred_fallthru
      _
    %3133 = vsyncpa [#allocation3], 1

</llo_original>
